<compile_context>
chip_gen: v7x
topology: tpu7x:2x2x1
jax: 0.10.0
libtpu: 0.0.40
codegen_flags: <defaults>
</compile_context>

<pallas_src>
import functools
import random

import numpy as np
import jax
import jax.numpy as jnp
from jax.experimental import pallas as pl
from jax.experimental.pallas import tpu as pltpu


# ----------------------------- host-side (glue) helpers -----------------------------

def _round_up(x, m):
    return ((x + m - 1) // m) * m


def _cdiv(a, b):
    return (a + b - 1) // b


def mel_frequencies(n_mels, fmin, fmax):
    """HTK mel-spaced frequencies (same formula as julius.mel_frequencies)."""
    low = 2595.0 * np.log10(1.0 + fmin / 700.0)
    high = 2595.0 * np.log10(1.0 + fmax / 700.0)
    mels = np.linspace(low, high, n_mels)
    return 700.0 * (10.0 ** (mels / 2595.0) - 1.0)


def lowpass_filter_bank(cutoffs, width):
    """Replicates LowPassFilters.__init__ filter construction. Returns (F, K) float32."""
    K = 2 * width + 1
    window = np.hamming(K).astype(np.float32)  # == torch.hamming_window(K, periodic=False)
    t = np.arange(-width, width + 1, dtype=np.float32)
    filts = []
    for c in cutoffs:
        sinc = np.sinc(2.0 * c * t).astype(np.float32)
        filts.append((2.0 * c * sinc * window).astype(np.float32))
    return np.stack(filts, axis=0)


def _band_toeplitz(taps, tn, tnk):
    """Shift-invariant (tnk, tn) band block: W[m, j] = taps[m - j] (0 outside the band).

    Small (independent of the waveform length T); built once per call.
    """
    K = taps.shape[-1]
    m = np.arange(tnk)[:, None]
    j = np.arange(tn)[None, :]
    idx = m - j
    mask = (idx >= 0) & (idx < K)
    return np.where(mask, taps[np.clip(idx, 0, K - 1)], 0.0).astype(np.float32)


# ----------------------------------- Pallas kernel ----------------------------------

def _bandmask_kernel(lhs_ref, whi_ref, wlo_ref, o_ref, *, width, tn):
    # lhs_ref: (M_BLK, TNK) f32 overlapping input slabs (segments folded into M rows).
    # whi/wlo: (TNK, TN) bf16 hi/lo split of the fused band filter (VMEM-resident).
    lhs = lhs_ref[...]
    lhs_hi = lhs.astype(jnp.bfloat16)
    lhs_lo = (lhs - lhs_hi.astype(jnp.float32)).astype(jnp.bfloat16)
    w_hi = whi_ref[...]
    w_lo = wlo_ref[...]
    # bf16x3 decomposition: ~Precision.HIGH accuracy at 3 MXU passes (vs 6 for HIGHEST).
    acc = jnp.dot(lhs_hi, w_hi, preferred_element_type=jnp.float32)
    acc += jnp.dot(lhs_hi, w_lo, preferred_element_type=jnp.float32)
    acc += jnp.dot(lhs_lo, w_hi, preferred_element_type=jnp.float32)
    # out = x + conv(x, f_low - f_high); the raw x tile is the interior of the slab.
    o_ref[...] = (lhs[:, width:width + tn] + acc).astype(o_ref.dtype)


@functools.partial(jax.jit, static_argnames=("width", "tn"))
def _bandmask_apply(x, w_hi, w_lo, *, width, tn):
    N, T = x.shape
    tnk = w_hi.shape[0]              # rounded-up contraction width (tn + K - 1)
    num_seg = _cdiv(T, tn)
    t_pad = num_seg * tn

    # Zero-padded signal, long enough for the (rounded-up) slab of the last segment.
    L = (num_seg - 1) * tn + tnk
    xpad = jnp.pad(x, ((0, 0), (width, L - width - T)))

    # Overlapping per-segment slabs, folded into the matmul M dimension.
    col = jnp.arange(num_seg, dtype=jnp.int32)[:, None] * tn \
        + jnp.arange(tnk, dtype=jnp.int32)[None, :]
    seg = jnp.take(xpad, col, axis=1)                       # (N, num_seg, tnk)
    seg = jnp.swapaxes(seg, 0, 1).reshape(num_seg * N, tnk)  # (R, tnk)

    R = num_seg * N
    if R >= 256:
        m_blk = 256
    elif R >= 128:
        m_blk = 128
    else:
        m_blk = _round_up(R, 8)
    r_pad = _round_up(R, m_blk)
    if r_pad != R:
        seg = jnp.pad(seg, ((0, r_pad - R), (0, 0)))

    grid_m = r_pad // m_blk
    kernel = functools.partial(_bandmask_kernel, width=width, tn=tn)
    out_rows = pl.pallas_call(
        kernel,
        out_shape=jax.ShapeDtypeStruct((r_pad, tn), x.dtype),
        grid=(grid_m,),
        in_specs=[
            pl.BlockSpec((m_blk, tnk), lambda m: (m, 0)),  # streaming input slabs
            pl.BlockSpec((tnk, tn), lambda m: (0, 0)),     # resident weight (hi part)
            pl.BlockSpec((tnk, tn), lambda m: (0, 0)),     # resident weight (lo part)
        ],
        out_specs=pl.BlockSpec((m_blk, tn), lambda m: (m, 0)),
        compiler_params=pltpu.CompilerParams(
            dimension_semantics=("parallel",),            # v7x: shard row blocks on 2 TCs
            vmem_limit_bytes=48 * 1024 * 1024,            # fits v7x's 64 MiB VMEM
        ),
    )(seg, w_hi, w_lo)

    out = out_rows[:R].reshape(num_seg, N, tn)
    out = jnp.swapaxes(out, 0, 1).reshape(N, t_pad)
    return out[:, :T]


def bandmask_pallas(x, taps, width, *, tn=None):
    """out = x + conv1d(x, taps, padding=width) via a banded, tiled MXU matmul."""
    N, T = x.shape
    K = int(taps.shape[-1])                     # == 2 * width + 1
    if tn is None:
        tn = min(512, _round_up(T, 128))        # lane-dense output tile (multiple of 128)
    tnk = _round_up(tn + K - 1, 16)             # contraction width, layout-friendly
    w32 = jnp.asarray(_band_toeplitz(np.asarray(taps, np.float32), tn, tnk))
    w_hi = w32.astype(jnp.bfloat16)
    w_lo = (w32 - w_hi.astype(jnp.float32)).astype(jnp.bfloat16)
    return _bandmask_apply(x.astype(jnp.float32), w_hi, w_lo, width=width, tn=tn)


# -------------------------------- BandMask module port -------------------------------

class BandMaskPallas:
    def __init__(self, maxwidth=0.2, bands=120, sample_rate=16000, rng=None, seed=42):
        self.maxwidth = maxwidth
        self.bands = bands
        self.sample_rate = sample_rate
        self.seed = seed
        self.rng = rng if rng is not None else random.Random(self.seed)
        # kept for the reference check in __main__
        self.last_filters = None
        self.last_width = None

    def __call__(self, samples):
        # TODO(synk): the random band selection + filter construction is inherently
        # host-side scalar logic (Python RNG + tiny NumPy); it stays outside the kernel.
        raw_wav = samples["raw_wav"]
        orig_ndim = raw_wav.ndim
        if orig_ndim == 2:
            B, T = raw_wav.shape
            C = 1
            x = raw_wav
        else:  # (B, C, T)
            B, C, T = raw_wav.shape
            x = raw_wav.reshape(B * C, T)

        bands = self.bands
        bandwidth = int(abs(self.maxwidth) * bands)
        mels = mel_frequencies(bands, 40, self.sample_rate / 2) / self.sample_rate
        low = self.rng.randrange(bands)
        high = self.rng.randrange(low, min(bands, low + bandwidth))
        cutoffs = [float(mels[low]), float(mels[high])]
        width = int(2 / min(cutoffs))

        filts = lowpass_filter_bank(cutoffs, width)          # (2, K)
        taps = (filts[0] - filts[1]).astype(np.float32)      # fused: out = x + conv(x, taps)

        self.last_filters = filts
        self.last_width = width

        out = bandmask_pallas(x.astype(jnp.float32), taps, width)

        if orig_ndim == 2:
            samples["raw_wav"] = out                 # torch squeezes back to (B, T)
        else:
            out = out.reshape(B, C, T)
            if C == 1:
                out = out[:, 0, :]                   # matches torch .squeeze(1)
            samples["raw_wav"] = out
        return samples


# ------------------------------------ reference --------------------------------------

def _reference_numpy(x, filts, width):
    """conv1d(padding=width) reference in float64, mirroring the torch forward."""
    N, T = x.shape
    xpad = np.pad(x.astype(np.float64), ((0, 0), (width, width)))
    conv = []
    for f in range(filts.shape[0]):
        w = filts[f].astype(np.float64)
        conv.append(np.stack([np.correlate(xpad[n], w, mode="valid") for n in range(N)]))
    low, midlow = conv[0], conv[1]
    return x.astype(np.float64) - midlow + low


if __name__ == "__main__":
    k2d, k3d = jax.random.split(jax.random.PRNGKey(0))

    bm = BandMaskPallas(maxwidth=0.2, bands=120, sample_rate=16000, seed=42)

    # 2-D input (B, T) -> stays (B, T)
    B, T = 2, 4000
    raw2 = jax.random.normal(k2d, (B, T), dtype=jnp.float32)
    out2 = jax.block_until_ready(bm({"raw_wav": raw2})["raw_wav"])
    assert out2.shape == (B, T) and out2.dtype == jnp.float32
    ref2 = _reference_numpy(np.asarray(raw2, np.float32), bm.last_filters, bm.last_width)
    np.testing.assert_allclose(np.asarray(out2), ref2, atol=2e-3, rtol=2e-3)

    # 3-D input (B, C, T) with C > 1 -> stays (B, C, T), like the torch module
    B3, C3, T3 = 2, 2, 2000
    raw3 = jax.random.normal(k3d, (B3, C3, T3), dtype=jnp.float32)
    out3 = jax.block_until_ready(bm({"raw_wav": raw3})["raw_wav"])
    assert out3.shape == (B3, C3, T3) and out3.dtype == jnp.float32
    ref3 = _reference_numpy(np.asarray(raw3, np.float32).reshape(B3 * C3, T3),
                            bm.last_filters, bm.last_width)
    np.testing.assert_allclose(np.asarray(out3).reshape(B3 * C3, T3), ref3,
                               atol=2e-3, rtol=2e-3)

    print("KERNEL_OK")
</pallas_src>

<mosaic_0001>
module attributes {stable_mosaic.version = 11 : i64} {
  func.func private @main(%arg0: i32) attributes {dimension_semantics = [#tpu.dimension_semantics<core_parallel>], iteration_bounds = array<i64: 2>, tpu.core_type = #tpu.core_type<sc_scalar_subcore>, window_params = []} {
    return
  }
}

module attributes {stable_mosaic.version = 11 : i64} {
  func.func private @main(%arg0: i32) attributes {dimension_semantics = [#tpu.dimension_semantics<core_parallel>], iteration_bounds = array<i64: 2>, tpu.core_type = #tpu.core_type<sc_scalar_subcore>, window_params = []} {
    return
  }
}

module attributes {stable_mosaic.version = 11 : i64} {
  func.func @_bandmask_kernel(%arg0: i32, %arg1: memref<16x544xf32, #tpu.memory_space<vmem>>, %arg2: memref<544x512xbf16, #tpu.memory_space<vmem>>, %arg3: memref<544x512xbf16, #tpu.memory_space<vmem>>, %arg4: memref<16x512xf32, #tpu.memory_space<vmem>>) attributes {dimension_semantics = [#tpu.dimension_semantics<parallel>], iteration_bounds = array<i64: 1>, scalar_prefetch = 0 : i64, scratch_operands = 0 : i64, tpu.core_type = #tpu.core_type<tc>, window_params = [{transform_indices = @transform_0, window_bounds = array<i64: 16, 544>}, {pipeline_mode = #tpu.pipeline_mode<synchronous>, transform_indices = @transform_1, window_bounds = array<i64: 544, 512>}, {pipeline_mode = #tpu.pipeline_mode<synchronous>, transform_indices = @transform_2, window_bounds = array<i64: 544, 512>}, {transform_indices = @transform_3, window_bounds = array<i64: 16, 512>}]} {
    %c0 = arith.constant 0 : index
    %c0_0 = arith.constant 0 : index
    %0 = vector.load %arg1[%c0, %c0_0] : memref<16x544xf32, #tpu.memory_space<vmem>>, vector<16x544xf32>
    %1 = arith.truncf %0 : vector<16x544xf32> to vector<16x544xbf16>
    %2 = arith.extf %1 : vector<16x544xbf16> to vector<16x544xf32>
    %3 = arith.subf %0, %2 : vector<16x544xf32>
    %4 = arith.truncf %3 : vector<16x544xf32> to vector<16x544xbf16>
    %c0_1 = arith.constant 0 : index
    %c0_2 = arith.constant 0 : index
    %5 = vector.load %arg2[%c0_1, %c0_2] : memref<544x512xbf16, #tpu.memory_space<vmem>>, vector<544x512xbf16>
    %c0_3 = arith.constant 0 : index
    %c0_4 = arith.constant 0 : index
    %6 = vector.load %arg3[%c0_3, %c0_4] : memref<544x512xbf16, #tpu.memory_space<vmem>>, vector<544x512xbf16>
    %cst = arith.constant dense<0.000000e+00> : vector<16x512xf32>
    %7 = tpu.matmul %1, %5, %cst {dimension_numbers = #tpu.dot_dimension_numbers<[1], [0], [0], [1], [0, 0, 1, 1], [], []>} : vector<16x544xbf16>, vector<544x512xbf16>, vector<16x512xf32> -> vector<16x512xf32>
    %cst_5 = arith.constant dense<0.000000e+00> : vector<16x512xf32>
    %8 = tpu.matmul %1, %6, %cst_5 {dimension_numbers = #tpu.dot_dimension_numbers<[1], [0], [0], [1], [0, 0, 1, 1], [], []>} : vector<16x544xbf16>, vector<544x512xbf16>, vector<16x512xf32> -> vector<16x512xf32>
    %9 = arith.addf %7, %8 : vector<16x512xf32>
    %cst_6 = arith.constant dense<0.000000e+00> : vector<16x512xf32>
    %10 = tpu.matmul %4, %5, %cst_6 {dimension_numbers = #tpu.dot_dimension_numbers<[1], [0], [0], [1], [0, 0, 1, 1], [], []>} : vector<16x544xbf16>, vector<544x512xbf16>, vector<16x512xf32> -> vector<16x512xf32>
    %11 = arith.addf %9, %10 : vector<16x512xf32>
    %12 = vector.extract_strided_slice %0 {offsets = [0, 9], sizes = [16, 512], strides = [1, 1]} : vector<16x544xf32> to vector<16x512xf32>
    %13 = arith.addf %12, %11 : vector<16x512xf32>
    %c0_7 = arith.constant 0 : index
    %c0_8 = arith.constant 0 : index
    %14 = vector.load %arg4[%c0_7, %c0_8] : memref<16x512xf32, #tpu.memory_space<vmem>>, vector<16x512xf32>
    tpu.vector_store %arg4[%c0_7, %c0_8], %13 {strides = array<i32>} : memref<16x512xf32, #tpu.memory_space<vmem>>, vector<16x512xf32>,
    return
  }
  func.func @transform_0(%arg0: i32) -> (i32, i32) {
    %c0_i32 = arith.constant 0 : i32
    %c0_i32_0 = arith.constant 0 : i32
    return %arg0, %c0_i32 : i32, i32
  }
  func.func @transform_1(%arg0: i32) -> (i32, i32) {
    %c0_i32 = arith.constant 0 : i32
    %c0_i32_0 = arith.constant 0 : i32
    %c0_i32_1 = arith.constant 0 : i32
    return %c0_i32, %c0_i32_0 : i32, i32
  }
  func.func @transform_2(%arg0: i32) -> (i32, i32) {
    %c0_i32 = arith.constant 0 : i32
    %c0_i32_0 = arith.constant 0 : i32
    %c0_i32_1 = arith.constant 0 : i32
    return %c0_i32, %c0_i32_0 : i32, i32
  }
  func.func @transform_3(%arg0: i32) -> (i32, i32) {
    %c0_i32 = arith.constant 0 : i32
    %c0_i32_0 = arith.constant 0 : i32
    return %arg0, %c0_i32 : i32, i32
  }
}

</mosaic_0001>

<llo_original>
// kernel: _bandmask_apply.1
$region0: #{_bandmask_apply.1}
  #allocation0 [shape = 'u32[]', space=smem, size = 0x4, offset = 0x4, fixed_abs, tag = 'smem constant byte address 0x4 - core index']
  #allocation1 [shape = 'u32[144,128]{1,0:T(1,128)}', space=vmem, size = 0x12000, scoped, tag = 'internal scratch']
  %s0 = inlined_call_operand.vmem [shape: f32[16,544], index: 0, kind: input, shape index: {}]
  %s1 = inlined_call_operand.vmem [shape: bf16[544,512], index: 1, kind: input, shape index: {}]
  %s2 = inlined_call_operand.vmem [shape: bf16[544,512], index: 2, kind: input, shape index: {}]
  %s3 = inlined_call_operand.vmem [shape: f32[16,512], index: 3, kind: output, shape index: {}]
  %s4 = sld [smem:[#allocation0]]
  $region22: #{_bandmask_apply.1} parent=0
    _
  %s6 = ssub.s32 1, %s4
  %s7 = scalar_select 0, %s6, %s4
  // Predicated region
  $region2: #{_bandmask_apply.1} parent=0 // pred_check
    _
  $region3: #{_bandmask_apply.1} parent=0 // pred_check_branch
    %9 = sbr.rel (0) target = $region5
  $region4: #{_bandmask_apply.1} parent=0 // pred_region
    _
  $region5: #{_bandmask_apply.1} parent=0 // pred_fallthru
    _
  // Predicated region
  $region6: #{_bandmask_apply.1} parent=0 // pred_check
    _
  $region7: #{_bandmask_apply.1} parent=0 // pred_check_branch
    %11 = sbr.rel (0) target = $region9
  $region8: #{_bandmask_apply.1} parent=0 // pred_region
    _
  $region9: #{_bandmask_apply.1} parent=0 // pred_fallthru
    _
  // Predicated region
  $region10: #{_bandmask_apply.1} parent=0 // pred_check
    _
  $region11: #{_bandmask_apply.1} parent=0 // pred_check_branch
    %13 = sbr.rel (0) target = $region13
  $region12: #{_bandmask_apply.1} parent=0 // pred_region
    _
  $region13: #{_bandmask_apply.1} parent=0 // pred_fallthru
    _
  %v15 = vld [vmem:[%s0] sm:$0xff]
  %v16 = vld [vmem:[%s0 + $0x8] sm:$0xff]
  %v17 = vld [vmem:[%s0 + $0x10] sm:$0xff]
  %v18 = vld [vmem:[%s0 + $0x18] sm:$0xff]
  %v19 = vld [vmem:[%s0 + $0x20] sm:$0xff]
  %v20 = vld [vmem:[%s0 + $0x28] sm:$0xff]
  %v21 = vld [vmem:[%s0 + $0x30] sm:$0xff]
  %v22 = vld [vmem:[%s0 + $0x38] sm:$0xff]
  %v23 = vld [vmem:[%s0 + $0x40] sm:$0xff]
  %v24 = vld [vmem:[%s0 + $0x48] sm:$0xff]
  %v25 = vpack.c.bf16 %v20, %v15
  %v26 = vpack.c.bf16 %v21, %v16
  %v27 = vpack.c.bf16 %v22, %v17
  %v28 = vpack.c.bf16 %v23, %v18
  %v29 = vpack.c.bf16 %v24, %v19
  %v30 = vunpack.c.l.bf16 %v25
  %v31 = vunpack.c.l.bf16 %v26
  %v32 = vunpack.c.l.bf16 %v27
  %v33 = vunpack.c.l.bf16 %v28
  %v34 = vunpack.c.l.bf16 %v29
  %v35 = vunpack.c.h.bf16 %v25
  %v36 = vunpack.c.h.bf16 %v26
  %v37 = vunpack.c.h.bf16 %v27
  %v38 = vunpack.c.h.bf16 %v28
  %v39 = vunpack.c.h.bf16 %v29
  %v40 = vsub.f32 %v15, %v30
  %v41 = vsub.f32 %v16, %v31
  %v42 = vsub.f32 %v17, %v32
  %v43 = vsub.f32 %v18, %v33
  %v44 = vsub.f32 %v19, %v34
  %v45 = vsub.f32 %v20, %v35
  %v46 = vsub.f32 %v21, %v36
  %v47 = vsub.f32 %v22, %v37
  %v48 = vsub.f32 %v23, %v38
  %v49 = vsub.f32 %v24, %v39
  %v50 = vpack.c.bf16 %v45, %v40
  %v51 = vpack.c.bf16 %v46, %v41
  %v52 = vpack.c.bf16 %v47, %v42
  %v53 = vpack.c.bf16 %v48, %v43
  %v54 = vpack.c.bf16 %v49, %v44
  %v55 = vld [vmem:[%s1] sm:$0xff]
  %v56 = vld [vmem:[%s1 + $0x8] sm:$0xff]
  %v57 = vld [vmem:[%s1 + $0x10] sm:$0xff]
  %v58 = vld [vmem:[%s1 + $0x18] sm:$0xff]
  %v59 = vld [vmem:[%s1 + $0x20] sm:$0xff]
  %v60 = vld [vmem:[%s1 + $0x28] sm:$0xff]
  %v61 = vld [vmem:[%s1 + $0x30] sm:$0xff]
  %v62 = vld [vmem:[%s1 + $0x38] sm:$0xff]
  %v63 = vld [vmem:[%s1 + $0x40] sm:$0xff]
  %v64 = vld [vmem:[%s1 + $0x48] sm:$0xff]
  %v65 = vld [vmem:[%s1 + $0x50] sm:$0xff]
  %v66 = vld [vmem:[%s1 + $0x58] sm:$0xff]
  %v67 = vld [vmem:[%s1 + $0x60] sm:$0xff]
  %v68 = vld [vmem:[%s1 + $0x68] sm:$0xff]
  %v69 = vld [vmem:[%s1 + $0x70] sm:$0xff]
  %v70 = vld [vmem:[%s1 + $0x78] sm:$0xff]
  %v71 = vld [vmem:[%s1 + $0x80] sm:$0xff]
  %v72 = vld [vmem:[%s1 + $0x88] sm:$0xff]
  %v73 = vld [vmem:[%s1 + $0x90] sm:$0xff]
  %v74 = vld [vmem:[%s1 + $0x98] sm:$0xff]
  %v75 = vld [vmem:[%s1 + $0xa0] sm:$0xff]
  %v76 = vld [vmem:[%s1 + $0xa8] sm:$0xff]
  %v77 = vld [vmem:[%s1 + $0xb0] sm:$0xff]
  %v78 = vld [vmem:[%s1 + $0xb8] sm:$0xff]
  %v79 = vld [vmem:[%s1 + $0xc0] sm:$0xff]
  %v80 = vld [vmem:[%s1 + $0xc8] sm:$0xff]
  %v81 = vld [vmem:[%s1 + $0xd0] sm:$0xff]
  %v82 = vld [vmem:[%s1 + $0xd8] sm:$0xff]
  %v83 = vld [vmem:[%s1 + $0xe0] sm:$0xff]
  %v84 = vld [vmem:[%s1 + $0xe8] sm:$0xff]
  %v85 = vld [vmem:[%s1 + $0xf0] sm:$0xff]
  %v86 = vld [vmem:[%s1 + $0xf8] sm:$0xff]
  %v87 = vld [vmem:[%s1 + $0x100] sm:$0xff]
  %v88 = vld [vmem:[%s1 + $0x108] sm:$0xff]
  %v89 = vld [vmem:[%s1 + $0x110] sm:$0xff]
  %v90 = vld [vmem:[%s1 + $0x118] sm:$0xff]
  %v91 = vld [vmem:[%s1 + $0x120] sm:$0xff]
  %v92 = vld [vmem:[%s1 + $0x128] sm:$0xff]
  %v93 = vld [vmem:[%s1 + $0x130] sm:$0xff]
  %v94 = vld [vmem:[%s1 + $0x138] sm:$0xff]
  %v95 = vld [vmem:[%s1 + $0x140] sm:$0xff]
  %v96 = vld [vmem:[%s1 + $0x148] sm:$0xff]
  %v97 = vld [vmem:[%s1 + $0x150] sm:$0xff]
  %v98 = vld [vmem:[%s1 + $0x158] sm:$0xff]
  %v99 = vld [vmem:[%s1 + $0x160] sm:$0xff]
  %v100 = vld [vmem:[%s1 + $0x168] sm:$0xff]
  %v101 = vld [vmem:[%s1 + $0x170] sm:$0xff]
  %v102 = vld [vmem:[%s1 + $0x178] sm:$0xff]
  %v103 = vld [vmem:[%s1 + $0x180] sm:$0xff]
  %v104 = vld [vmem:[%s1 + $0x188] sm:$0xff]
  %v105 = vld [vmem:[%s1 + $0x190] sm:$0xff]
  %v106 = vld [vmem:[%s1 + $0x198] sm:$0xff]
  %v107 = vld [vmem:[%s1 + $0x1a0] sm:$0xff]
  %v108 = vld [vmem:[%s1 + $0x1a8] sm:$0xff]
  %v109 = vld [vmem:[%s1 + $0x1b0] sm:$0xff]
  %v110 = vld [vmem:[%s1 + $0x1b8] sm:$0xff]
  %v111 = vld [vmem:[%s1 + $0x1c0] sm:$0xff]
  %v112 = vld [vmem:[%s1 + $0x1c8] sm:$0xff]
  %v113 = vld [vmem:[%s1 + $0x1d0] sm:$0xff]
  %v114 = vld [vmem:[%s1 + $0x1d8] sm:$0xff]
  %v115 = vld [vmem:[%s1 + $0x1e0] sm:$0xff]
  %v116 = vld [vmem:[%s1 + $0x1e8] sm:$0xff]
  %v117 = vld [vmem:[%s1 + $0x1f0] sm:$0xff]
  %v118 = vld [vmem:[%s1 + $0x1f8] sm:$0xff]
  %v119 = vld [vmem:[%s1 + $0x200] sm:$0xff]
  %v120 = vld [vmem:[%s1 + $0x208] sm:$0xff]
  %v121 = vld [vmem:[%s1 + $0x210] sm:$0xff]
  %v122 = vld [vmem:[%s1 + $0x218] sm:$0xff]
  %v123 = vld [vmem:[%s1 + $0x220] sm:$0xff]
  %v124 = vld [vmem:[%s1 + $0x228] sm:$0xff]
  %v125 = vld [vmem:[%s1 + $0x230] sm:$0xff]
  %v126 = vld [vmem:[%s1 + $0x238] sm:$0xff]
  %v127 = vld [vmem:[%s1 + $0x240] sm:$0xff]
  %v128 = vld [vmem:[%s1 + $0x248] sm:$0xff]
  %v129 = vld [vmem:[%s1 + $0x250] sm:$0xff]
  %v130 = vld [vmem:[%s1 + $0x258] sm:$0xff]
  %v131 = vld [vmem:[%s1 + $0x260] sm:$0xff]
  %v132 = vld [vmem:[%s1 + $0x268] sm:$0xff]
  %v133 = vld [vmem:[%s1 + $0x270] sm:$0xff]
  %v134 = vld [vmem:[%s1 + $0x278] sm:$0xff]
  %v135 = vld [vmem:[%s1 + $0x280] sm:$0xff]
  %v136 = vld [vmem:[%s1 + $0x288] sm:$0xff]
  %v137 = vld [vmem:[%s1 + $0x290] sm:$0xff]
  %v138 = vld [vmem:[%s1 + $0x298] sm:$0xff]
  %v139 = vld [vmem:[%s1 + $0x2a0] sm:$0xff]
  %v140 = vld [vmem:[%s1 + $0x2a8] sm:$0xff]
  %v141 = vld [vmem:[%s1 + $0x2b0] sm:$0xff]
  %v142 = vld [vmem:[%s1 + $0x2b8] sm:$0xff]
  %v143 = vld [vmem:[%s1 + $0x2c0] sm:$0xff]
  %v144 = vld [vmem:[%s1 + $0x2c8] sm:$0xff]
  %v145 = vld [vmem:[%s1 + $0x2d0] sm:$0xff]
  %v146 = vld [vmem:[%s1 + $0x2d8] sm:$0xff]
  %v147 = vld [vmem:[%s1 + $0x2e0] sm:$0xff]
  %v148 = vld [vmem:[%s1 + $0x2e8] sm:$0xff]
  %v149 = vld [vmem:[%s1 + $0x2f0] sm:$0xff]
  %v150 = vld [vmem:[%s1 + $0x2f8] sm:$0xff]
  %v151 = vld [vmem:[%s1 + $0x300] sm:$0xff]
  %v152 = vld [vmem:[%s1 + $0x308] sm:$0xff]
  %v153 = vld [vmem:[%s1 + $0x310] sm:$0xff]
  %v154 = vld [vmem:[%s1 + $0x318] sm:$0xff]
  %v155 = vld [vmem:[%s1 + $0x320] sm:$0xff]
  %v156 = vld [vmem:[%s1 + $0x328] sm:$0xff]
  %v157 = vld [vmem:[%s1 + $0x330] sm:$0xff]
  %v158 = vld [vmem:[%s1 + $0x338] sm:$0xff]
  %v159 = vld [vmem:[%s1 + $0x340] sm:$0xff]
  %v160 = vld [vmem:[%s1 + $0x348] sm:$0xff]
  %v161 = vld [vmem:[%s1 + $0x350] sm:$0xff]
  %v162 = vld [vmem:[%s1 + $0x358] sm:$0xff]
  %v163 = vld [vmem:[%s1 + $0x360] sm:$0xff]
  %v164 = vld [vmem:[%s1 + $0x368] sm:$0xff]
  %v165 = vld [vmem:[%s1 + $0x370] sm:$0xff]
  %v166 = vld [vmem:[%s1 + $0x378] sm:$0xff]
  %v167 = vld [vmem:[%s1 + $0x380] sm:$0xff]
  %v168 = vld [vmem:[%s1 + $0x388] sm:$0xff]
  %v169 = vld [vmem:[%s1 + $0x390] sm:$0xff]
  %v170 = vld [vmem:[%s1 + $0x398] sm:$0xff]
  %v171 = vld [vmem:[%s1 + $0x3a0] sm:$0xff]
  %v172 = vld [vmem:[%s1 + $0x3a8] sm:$0xff]
  %v173 = vld [vmem:[%s1 + $0x3b0] sm:$0xff]
  %v174 = vld [vmem:[%s1 + $0x3b8] sm:$0xff]
  %v175 = vld [vmem:[%s1 + $0x3c0] sm:$0xff]
  %v176 = vld [vmem:[%s1 + $0x3c8] sm:$0xff]
  %v177 = vld [vmem:[%s1 + $0x3d0] sm:$0xff]
  %v178 = vld [vmem:[%s1 + $0x3d8] sm:$0xff]
  %v179 = vld [vmem:[%s1 + $0x3e0] sm:$0xff]
  %v180 = vld [vmem:[%s1 + $0x3e8] sm:$0xff]
  %v181 = vld [vmem:[%s1 + $0x3f0] sm:$0xff]
  %v182 = vld [vmem:[%s1 + $0x3f8] sm:$0xff]
  %v183 = vld [vmem:[%s1 + $0x400] sm:$0xff]
  %v184 = vld [vmem:[%s1 + $0x408] sm:$0xff]
  %v185 = vld [vmem:[%s1 + $0x410] sm:$0xff]
  %v186 = vld [vmem:[%s1 + $0x418] sm:$0xff]
  %v187 = vld [vmem:[%s1 + $0x420] sm:$0xff]
  %v188 = vld [vmem:[%s1 + $0x428] sm:$0xff]
  %v189 = vld [vmem:[%s1 + $0x430] sm:$0xff]
  %v190 = vld [vmem:[%s1 + $0x438] sm:$0xff]
  %v191 = vld [vmem:[%s2] sm:$0xff]
  %v192 = vld [vmem:[%s2 + $0x8] sm:$0xff]
  %v193 = vld [vmem:[%s2 + $0x10] sm:$0xff]
  %v194 = vld [vmem:[%s2 + $0x18] sm:$0xff]
  %v195 = vld [vmem:[%s2 + $0x20] sm:$0xff]
  %v196 = vld [vmem:[%s2 + $0x28] sm:$0xff]
  %v197 = vld [vmem:[%s2 + $0x30] sm:$0xff]
  %v198 = vld [vmem:[%s2 + $0x38] sm:$0xff]
  %v199 = vld [vmem:[%s2 + $0x40] sm:$0xff]
  %v200 = vld [vmem:[%s2 + $0x48] sm:$0xff]
  %v201 = vld [vmem:[%s2 + $0x50] sm:$0xff]
  %v202 = vld [vmem:[%s2 + $0x58] sm:$0xff]
  %v203 = vld [vmem:[%s2 + $0x60] sm:$0xff]
  %v204 = vld [vmem:[%s2 + $0x68] sm:$0xff]
  %v205 = vld [vmem:[%s2 + $0x70] sm:$0xff]
  %v206 = vld [vmem:[%s2 + $0x78] sm:$0xff]
  %v207 = vld [vmem:[%s2 + $0x80] sm:$0xff]
  %v208 = vld [vmem:[%s2 + $0x88] sm:$0xff]
  %v209 = vld [vmem:[%s2 + $0x90] sm:$0xff]
  %v210 = vld [vmem:[%s2 + $0x98] sm:$0xff]
  %v211 = vld [vmem:[%s2 + $0xa0] sm:$0xff]
  %v212 = vld [vmem:[%s2 + $0xa8] sm:$0xff]
  %v213 = vld [vmem:[%s2 + $0xb0] sm:$0xff]
  %v214 = vld [vmem:[%s2 + $0xb8] sm:$0xff]
  %v215 = vld [vmem:[%s2 + $0xc0] sm:$0xff]
  %v216 = vld [vmem:[%s2 + $0xc8] sm:$0xff]
  %v217 = vld [vmem:[%s2 + $0xd0] sm:$0xff]
  %v218 = vld [vmem:[%s2 + $0xd8] sm:$0xff]
  %v219 = vld [vmem:[%s2 + $0xe0] sm:$0xff]
  %v220 = vld [vmem:[%s2 + $0xe8] sm:$0xff]
  %v221 = vld [vmem:[%s2 + $0xf0] sm:$0xff]
  %v222 = vld [vmem:[%s2 + $0xf8] sm:$0xff]
  %v223 = vld [vmem:[%s2 + $0x100] sm:$0xff]
  %v224 = vld [vmem:[%s2 + $0x108] sm:$0xff]
  %v225 = vld [vmem:[%s2 + $0x110] sm:$0xff]
  %v226 = vld [vmem:[%s2 + $0x118] sm:$0xff]
  %v227 = vld [vmem:[%s2 + $0x120] sm:$0xff]
  %v228 = vld [vmem:[%s2 + $0x128] sm:$0xff]
  %v229 = vld [vmem:[%s2 + $0x130] sm:$0xff]
  %v230 = vld [vmem:[%s2 + $0x138] sm:$0xff]
  %v231 = vld [vmem:[%s2 + $0x140] sm:$0xff]
  %v232 = vld [vmem:[%s2 + $0x148] sm:$0xff]
  %v233 = vld [vmem:[%s2 + $0x150] sm:$0xff]
  %v234 = vld [vmem:[%s2 + $0x158] sm:$0xff]
  %v235 = vld [vmem:[%s2 + $0x160] sm:$0xff]
  %v236 = vld [vmem:[%s2 + $0x168] sm:$0xff]
  %v237 = vld [vmem:[%s2 + $0x170] sm:$0xff]
  %v238 = vld [vmem:[%s2 + $0x178] sm:$0xff]
  %v239 = vld [vmem:[%s2 + $0x180] sm:$0xff]
  %v240 = vld [vmem:[%s2 + $0x188] sm:$0xff]
  %v241 = vld [vmem:[%s2 + $0x190] sm:$0xff]
  %v242 = vld [vmem:[%s2 + $0x198] sm:$0xff]
  %v243 = vld [vmem:[%s2 + $0x1a0] sm:$0xff]
  %v244 = vld [vmem:[%s2 + $0x1a8] sm:$0xff]
  %v245 = vld [vmem:[%s2 + $0x1b0] sm:$0xff]
  %v246 = vld [vmem:[%s2 + $0x1b8] sm:$0xff]
  %v247 = vld [vmem:[%s2 + $0x1c0] sm:$0xff]
  %v248 = vld [vmem:[%s2 + $0x1c8] sm:$0xff]
  %v249 = vld [vmem:[%s2 + $0x1d0] sm:$0xff]
  %v250 = vld [vmem:[%s2 + $0x1d8] sm:$0xff]
  %v251 = vld [vmem:[%s2 + $0x1e0] sm:$0xff]
  %v252 = vld [vmem:[%s2 + $0x1e8] sm:$0xff]
  %v253 = vld [vmem:[%s2 + $0x1f0] sm:$0xff]
  %v254 = vld [vmem:[%s2 + $0x1f8] sm:$0xff]
  %v255 = vld [vmem:[%s2 + $0x200] sm:$0xff]
  %v256 = vld [vmem:[%s2 + $0x208] sm:$0xff]
  %v257 = vld [vmem:[%s2 + $0x210] sm:$0xff]
  %v258 = vld [vmem:[%s2 + $0x218] sm:$0xff]
  %v259 = vld [vmem:[%s2 + $0x220] sm:$0xff]
  %v260 = vld [vmem:[%s2 + $0x228] sm:$0xff]
  %v261 = vld [vmem:[%s2 + $0x230] sm:$0xff]
  %v262 = vld [vmem:[%s2 + $0x238] sm:$0xff]
  %v263 = vld [vmem:[%s2 + $0x240] sm:$0xff]
  %v264 = vld [vmem:[%s2 + $0x248] sm:$0xff]
  %v265 = vld [vmem:[%s2 + $0x250] sm:$0xff]
  %v266 = vld [vmem:[%s2 + $0x258] sm:$0xff]
  %v267 = vld [vmem:[%s2 + $0x260] sm:$0xff]
  %v268 = vld [vmem:[%s2 + $0x268] sm:$0xff]
  %v269 = vld [vmem:[%s2 + $0x270] sm:$0xff]
  %v270 = vld [vmem:[%s2 + $0x278] sm:$0xff]
  %v271 = vld [vmem:[%s2 + $0x280] sm:$0xff]
  %v272 = vld [vmem:[%s2 + $0x288] sm:$0xff]
  %v273 = vld [vmem:[%s2 + $0x290] sm:$0xff]
  %v274 = vld [vmem:[%s2 + $0x298] sm:$0xff]
  %v275 = vld [vmem:[%s2 + $0x2a0] sm:$0xff]
  %v276 = vld [vmem:[%s2 + $0x2a8] sm:$0xff]
  %v277 = vld [vmem:[%s2 + $0x2b0] sm:$0xff]
  %v278 = vld [vmem:[%s2 + $0x2b8] sm:$0xff]
  %v279 = vld [vmem:[%s2 + $0x2c0] sm:$0xff]
  %v280 = vld [vmem:[%s2 + $0x2c8] sm:$0xff]
  %v281 = vld [vmem:[%s2 + $0x2d0] sm:$0xff]
  %v282 = vld [vmem:[%s2 + $0x2d8] sm:$0xff]
  %v283 = vld [vmem:[%s2 + $0x2e0] sm:$0xff]
  %v284 = vld [vmem:[%s2 + $0x2e8] sm:$0xff]
  %v285 = vld [vmem:[%s2 + $0x2f0] sm:$0xff]
  %v286 = vld [vmem:[%s2 + $0x2f8] sm:$0xff]
  %v287 = vld [vmem:[%s2 + $0x300] sm:$0xff]
  %v288 = vld [vmem:[%s2 + $0x308] sm:$0xff]
  %v289 = vld [vmem:[%s2 + $0x310] sm:$0xff]
  %v290 = vld [vmem:[%s2 + $0x318] sm:$0xff]
  %v291 = vld [vmem:[%s2 + $0x320] sm:$0xff]
  %v292 = vld [vmem:[%s2 + $0x328] sm:$0xff]
  %v293 = vld [vmem:[%s2 + $0x330] sm:$0xff]
  %v294 = vld [vmem:[%s2 + $0x338] sm:$0xff]
  %v295 = vld [vmem:[%s2 + $0x340] sm:$0xff]
  %v296 = vld [vmem:[%s2 + $0x348] sm:$0xff]
  %v297 = vld [vmem:[%s2 + $0x350] sm:$0xff]
  %v298 = vld [vmem:[%s2 + $0x358] sm:$0xff]
  %v299 = vld [vmem:[%s2 + $0x360] sm:$0xff]
  %v300 = vld [vmem:[%s2 + $0x368] sm:$0xff]
  %v301 = vld [vmem:[%s2 + $0x370] sm:$0xff]
  %v302 = vld [vmem:[%s2 + $0x378] sm:$0xff]
  %v303 = vld [vmem:[%s2 + $0x380] sm:$0xff]
  %v304 = vld [vmem:[%s2 + $0x388] sm:$0xff]
  %v305 = vld [vmem:[%s2 + $0x390] sm:$0xff]
  %v306 = vld [vmem:[%s2 + $0x398] sm:$0xff]
  %v307 = vld [vmem:[%s2 + $0x3a0] sm:$0xff]
  %v308 = vld [vmem:[%s2 + $0x3a8] sm:$0xff]
  %v309 = vld [vmem:[%s2 + $0x3b0] sm:$0xff]
  %v310 = vld [vmem:[%s2 + $0x3b8] sm:$0xff]
  %v311 = vld [vmem:[%s2 + $0x3c0] sm:$0xff]
  %v312 = vld [vmem:[%s2 + $0x3c8] sm:$0xff]
  %v313 = vld [vmem:[%s2 + $0x3d0] sm:$0xff]
  %v314 = vld [vmem:[%s2 + $0x3d8] sm:$0xff]
  %v315 = vld [vmem:[%s2 + $0x3e0] sm:$0xff]
  %v316 = vld [vmem:[%s2 + $0x3e8] sm:$0xff]
  %v317 = vld [vmem:[%s2 + $0x3f0] sm:$0xff]
  %v318 = vld [vmem:[%s2 + $0x3f8] sm:$0xff]
  %v319 = vld [vmem:[%s2 + $0x400] sm:$0xff]
  %v320 = vld [vmem:[%s2 + $0x408] sm:$0xff]
  %v321 = vld [vmem:[%s2 + $0x410] sm:$0xff]
  %v322 = vld [vmem:[%s2 + $0x418] sm:$0xff]
  %v323 = vld [vmem:[%s2 + $0x420] sm:$0xff]
  %v324 = vld [vmem:[%s2 + $0x428] sm:$0xff]
  %v325 = vld [vmem:[%s2 + $0x430] sm:$0xff]
  %v326 = vld [vmem:[%s2 + $0x438] sm:$0xff]
  %v463 = vunpack.c.l.b16 %v191
  %v464 = vunpack.c.h.b16 %v191
  %v465 = vunpack.c.l.b16 %v192
  %v466 = vunpack.c.h.b16 %v192
  %v467 = vunpack.c.l.b16 %v193
  %v468 = vunpack.c.h.b16 %v193
  %v469 = vunpack.c.l.b16 %v194
  %v470 = vunpack.c.h.b16 %v194
  %v471 = vunpack.c.l.b16 %v195
  %v472 = vunpack.c.h.b16 %v195
  %v473 = vunpack.c.l.b16 %v196
  %v474 = vunpack.c.h.b16 %v196
  %v475 = vunpack.c.l.b16 %v197
  %v476 = vunpack.c.h.b16 %v197
  %v477 = vunpack.c.l.b16 %v198
  %v478 = vunpack.c.h.b16 %v198
  %v479 = vunpack.c.l.b16 %v199
  %v480 = vunpack.c.h.b16 %v199
  %v481 = vunpack.c.l.b16 %v200
  %v482 = vunpack.c.h.b16 %v200
  %v483 = vunpack.c.l.b16 %v201
  %v484 = vunpack.c.h.b16 %v201
  %v485 = vunpack.c.l.b16 %v202
  %v486 = vunpack.c.h.b16 %v202
  %v487 = vunpack.c.l.b16 %v203
  %v488 = vunpack.c.h.b16 %v203
  %v489 = vunpack.c.l.b16 %v204
  %v490 = vunpack.c.h.b16 %v204
  %v491 = vunpack.c.l.b16 %v205
  %v492 = vunpack.c.h.b16 %v205
  %v493 = vunpack.c.l.b16 %v206
  %v494 = vunpack.c.h.b16 %v206
  %v495 = vunpack.c.l.b16 %v207
  %v496 = vunpack.c.h.b16 %v207
  %v497 = vunpack.c.l.b16 %v208
  %v498 = vunpack.c.h.b16 %v208
  %v499 = vunpack.c.l.b16 %v209
  %v500 = vunpack.c.h.b16 %v209
  %v501 = vunpack.c.l.b16 %v210
  %v502 = vunpack.c.h.b16 %v210
  %v503 = vunpack.c.l.b16 %v211
  %v504 = vunpack.c.h.b16 %v211
  %v505 = vunpack.c.l.b16 %v212
  %v506 = vunpack.c.h.b16 %v212
  %v507 = vunpack.c.l.b16 %v213
  %v508 = vunpack.c.h.b16 %v213
  %v509 = vunpack.c.l.b16 %v214
  %v510 = vunpack.c.h.b16 %v214
  %v511 = vunpack.c.l.b16 %v215
  %v512 = vunpack.c.h.b16 %v215
  %v513 = vunpack.c.l.b16 %v216
  %v514 = vunpack.c.h.b16 %v216
  %v515 = vunpack.c.l.b16 %v217
  %v516 = vunpack.c.h.b16 %v217
  %v517 = vunpack.c.l.b16 %v218
  %v518 = vunpack.c.h.b16 %v218
  %v519 = vunpack.c.l.b16 %v219
  %v520 = vunpack.c.h.b16 %v219
  %v521 = vunpack.c.l.b16 %v220
  %v522 = vunpack.c.h.b16 %v220
  %v523 = vunpack.c.l.b16 %v221
  %v524 = vunpack.c.h.b16 %v221
  %v525 = vunpack.c.l.b16 %v222
  %v526 = vunpack.c.h.b16 %v222
  %v527 = vunpack.c.l.b16 %v223
  %v528 = vunpack.c.h.b16 %v223
  %v529 = vunpack.c.l.b16 %v224
  %v530 = vunpack.c.h.b16 %v224
  %v531 = vunpack.c.l.b16 %v225
  %v532 = vunpack.c.h.b16 %v225
  %v533 = vunpack.c.l.b16 %v226
  %v534 = vunpack.c.h.b16 %v226
  %v535 = vunpack.c.l.b16 %v227
  %v536 = vunpack.c.h.b16 %v227
  %v537 = vunpack.c.l.b16 %v228
  %v538 = vunpack.c.h.b16 %v228
  %v539 = vunpack.c.l.b16 %v229
  %v540 = vunpack.c.h.b16 %v229
  %v541 = vunpack.c.l.b16 %v230
  %v542 = vunpack.c.h.b16 %v230
  %v543 = vunpack.c.l.b16 %v231
  %v544 = vunpack.c.h.b16 %v231
  %v545 = vunpack.c.l.b16 %v232
  %v546 = vunpack.c.h.b16 %v232
  %v547 = vunpack.c.l.b16 %v233
  %v548 = vunpack.c.h.b16 %v233
  %v549 = vunpack.c.l.b16 %v234
  %v550 = vunpack.c.h.b16 %v234
  %v551 = vunpack.c.l.b16 %v235
  %v552 = vunpack.c.h.b16 %v235
  %v553 = vunpack.c.l.b16 %v236
  %v554 = vunpack.c.h.b16 %v236
  %v555 = vunpack.c.l.b16 %v237
  %v556 = vunpack.c.h.b16 %v237
  %v557 = vunpack.c.l.b16 %v238
  %v558 = vunpack.c.h.b16 %v238
  %v559 = vunpack.c.l.b16 %v239
  %v560 = vunpack.c.h.b16 %v239
  %v561 = vunpack.c.l.b16 %v240
  %v562 = vunpack.c.h.b16 %v240
  %v563 = vunpack.c.l.b16 %v241
  %v564 = vunpack.c.h.b16 %v241
  %v565 = vunpack.c.l.b16 %v242
  %v566 = vunpack.c.h.b16 %v242
  %v567 = vunpack.c.l.b16 %v243
  %v568 = vunpack.c.h.b16 %v243
  %v569 = vunpack.c.l.b16 %v244
  %v570 = vunpack.c.h.b16 %v244
  %v571 = vunpack.c.l.b16 %v245
  %v572 = vunpack.c.h.b16 %v245
  %v573 = vunpack.c.l.b16 %v246
  %v574 = vunpack.c.h.b16 %v246
  %v575 = vunpack.c.l.b16 %v247
  %v576 = vunpack.c.h.b16 %v247
  %v577 = vunpack.c.l.b16 %v248
  %v578 = vunpack.c.h.b16 %v248
  %v579 = vunpack.c.l.b16 %v249
  %v580 = vunpack.c.h.b16 %v249
  %v581 = vunpack.c.l.b16 %v250
  %v582 = vunpack.c.h.b16 %v250
  %v583 = vunpack.c.l.b16 %v251
  %v584 = vunpack.c.h.b16 %v251
  %v585 = vunpack.c.l.b16 %v252
  %v586 = vunpack.c.h.b16 %v252
  %v587 = vunpack.c.l.b16 %v253
  %v588 = vunpack.c.h.b16 %v253
  %v589 = vunpack.c.l.b16 %v254
  %v590 = vunpack.c.h.b16 %v254
  %v591 = vunpack.c.l.b16 %v255
  %v592 = vunpack.c.h.b16 %v255
  %v593 = vunpack.c.l.b16 %v256
  %v594 = vunpack.c.h.b16 %v256
  %v595 = vunpack.c.l.b16 %v257
  %v596 = vunpack.c.h.b16 %v257
  %v597 = vunpack.c.l.b16 %v258
  %v598 = vunpack.c.h.b16 %v258
  %v599 = vunpack.c.l.b16 %v259
  %v600 = vunpack.c.h.b16 %v259
  %v601 = vunpack.c.l.b16 %v260
  %v602 = vunpack.c.h.b16 %v260
  %v603 = vunpack.c.l.b16 %v261
  %v604 = vunpack.c.h.b16 %v261
  %v605 = vunpack.c.l.b16 %v262
  %v606 = vunpack.c.h.b16 %v262
  %v607 = vunpack.c.l.b16 %v263
  %v608 = vunpack.c.h.b16 %v263
  %v609 = vunpack.c.l.b16 %v264
  %v610 = vunpack.c.h.b16 %v264
  %v611 = vunpack.c.l.b16 %v265
  %v612 = vunpack.c.h.b16 %v265
  %v613 = vunpack.c.l.b16 %v266
  %v614 = vunpack.c.h.b16 %v266
  %v615 = vunpack.c.l.b16 %v267
  %v616 = vunpack.c.h.b16 %v267
  %v617 = vunpack.c.l.b16 %v268
  %v618 = vunpack.c.h.b16 %v268
  %v619 = vunpack.c.l.b16 %v269
  %v620 = vunpack.c.h.b16 %v269
  %v621 = vunpack.c.l.b16 %v270
  %v622 = vunpack.c.h.b16 %v270
  %v623 = vunpack.c.l.b16 %v271
  %v624 = vunpack.c.h.b16 %v271
  %v625 = vunpack.c.l.b16 %v272
  %v626 = vunpack.c.h.b16 %v272
  %v627 = vunpack.c.l.b16 %v273
  %v628 = vunpack.c.h.b16 %v273
  %v629 = vunpack.c.l.b16 %v274
  %v630 = vunpack.c.h.b16 %v274
  %v631 = vunpack.c.l.b16 %v275
  %v632 = vunpack.c.h.b16 %v275
  %v633 = vunpack.c.l.b16 %v276
  %v634 = vunpack.c.h.b16 %v276
  %v635 = vunpack.c.l.b16 %v277
  %v636 = vunpack.c.h.b16 %v277
  %v637 = vunpack.c.l.b16 %v278
  %v638 = vunpack.c.h.b16 %v278
  %v639 = vunpack.c.l.b16 %v279
  %v640 = vunpack.c.h.b16 %v279
  %v641 = vunpack.c.l.b16 %v280
  %v642 = vunpack.c.h.b16 %v280
  %v643 = vunpack.c.l.b16 %v281
  %v644 = vunpack.c.h.b16 %v281
  %v645 = vunpack.c.l.b16 %v282
  %v646 = vunpack.c.h.b16 %v282
  %v647 = vunpack.c.l.b16 %v283
  %v648 = vunpack.c.h.b16 %v283
  %v649 = vunpack.c.l.b16 %v284
  %v650 = vunpack.c.h.b16 %v284
  %v651 = vunpack.c.l.b16 %v285
  %v652 = vunpack.c.h.b16 %v285
  %v653 = vunpack.c.l.b16 %v286
  %v654 = vunpack.c.h.b16 %v286
  %v655 = vunpack.c.l.b16 %v287
  %v656 = vunpack.c.h.b16 %v287
  %v657 = vunpack.c.l.b16 %v288
  %v658 = vunpack.c.h.b16 %v288
  %v659 = vunpack.c.l.b16 %v289
  %v660 = vunpack.c.h.b16 %v289
  %v661 = vunpack.c.l.b16 %v290
  %v662 = vunpack.c.h.b16 %v290
  %v663 = vunpack.c.l.b16 %v291
  %v664 = vunpack.c.h.b16 %v291
  %v665 = vunpack.c.l.b16 %v292
  %v666 = vunpack.c.h.b16 %v292
  %v667 = vunpack.c.l.b16 %v293
  %v668 = vunpack.c.h.b16 %v293
  %v669 = vunpack.c.l.b16 %v294
  %v670 = vunpack.c.h.b16 %v294
  %v671 = vunpack.c.l.b16 %v295
  %v672 = vunpack.c.h.b16 %v295
  %v673 = vunpack.c.l.b16 %v296
  %v674 = vunpack.c.h.b16 %v296
  %v675 = vunpack.c.l.b16 %v297
  %v676 = vunpack.c.h.b16 %v297
  %v677 = vunpack.c.l.b16 %v298
  %v678 = vunpack.c.h.b16 %v298
  %v679 = vunpack.c.l.b16 %v299
  %v680 = vunpack.c.h.b16 %v299
  %v681 = vunpack.c.l.b16 %v300
  %v682 = vunpack.c.h.b16 %v300
  %v683 = vunpack.c.l.b16 %v301
  %v684 = vunpack.c.h.b16 %v301
  %v685 = vunpack.c.l.b16 %v302
  %v686 = vunpack.c.h.b16 %v302
  %v687 = vunpack.c.l.b16 %v303
  %v688 = vunpack.c.h.b16 %v303
  %v689 = vunpack.c.l.b16 %v304
  %v690 = vunpack.c.h.b16 %v304
  %v691 = vunpack.c.l.b16 %v305
  %v692 = vunpack.c.h.b16 %v305
  %v693 = vunpack.c.l.b16 %v306
  %v694 = vunpack.c.h.b16 %v306
  %v695 = vunpack.c.l.b16 %v307
  %v696 = vunpack.c.h.b16 %v307
  %v697 = vunpack.c.l.b16 %v308
  %v698 = vunpack.c.h.b16 %v308
  %v699 = vunpack.c.l.b16 %v309
  %v700 = vunpack.c.h.b16 %v309
  %v701 = vunpack.c.l.b16 %v310
  %v702 = vunpack.c.h.b16 %v310
  %v703 = vunpack.c.l.b16 %v311
  %v704 = vunpack.c.h.b16 %v311
  %v705 = vunpack.c.l.b16 %v312
  %v706 = vunpack.c.h.b16 %v312
  %v707 = vunpack.c.l.b16 %v313
  %v708 = vunpack.c.h.b16 %v313
  %v709 = vunpack.c.l.b16 %v314
  %v710 = vunpack.c.h.b16 %v314
  %v711 = vunpack.c.l.b16 %v315
  %v712 = vunpack.c.h.b16 %v315
  %v713 = vunpack.c.l.b16 %v316
  %v714 = vunpack.c.h.b16 %v316
  %v715 = vunpack.c.l.b16 %v317
  %v716 = vunpack.c.h.b16 %v317
  %v717 = vunpack.c.l.b16 %v318
  %v718 = vunpack.c.h.b16 %v318
  %v719 = vunpack.c.l.b16 %v319
  %v720 = vunpack.c.h.b16 %v319
  %v721 = vunpack.c.l.b16 %v320
  %v722 = vunpack.c.h.b16 %v320
  %v723 = vunpack.c.l.b16 %v321
  %v724 = vunpack.c.h.b16 %v321
  %v725 = vunpack.c.l.b16 %v322
  %v726 = vunpack.c.h.b16 %v322
  %v727 = vunpack.c.l.b16 %v323
  %v728 = vunpack.c.h.b16 %v323
  %v729 = vunpack.c.l.b16 %v324
  %v730 = vunpack.c.h.b16 %v324
  %v731 = vunpack.c.l.b16 %v325
  %v732 = vunpack.c.h.b16 %v325
  %v733 = vunpack.c.l.b16 %v326
  %v734 = vunpack.c.h.b16 %v326
  %v735 = vpack.c.b16 %v467, %v463
  %v736 = vpack.c.b16 %v468, %v464
  %v737 = vpack.c.b16 %v469, %v465
  %v738 = vpack.c.b16 %v470, %v466
  %v739 = vpack.c.b16 %v475, %v471
  %v740 = vpack.c.b16 %v476, %v472
  %v741 = vpack.c.b16 %v477, %v473
  %v742 = vpack.c.b16 %v478, %v474
  %v743 = vpack.c.b16 %v483, %v479
  %v744 = vpack.c.b16 %v484, %v480
  %v745 = vpack.c.b16 %v485, %v481
  %v746 = vpack.c.b16 %v486, %v482
  %v747 = vpack.c.b16 %v491, %v487
  %v748 = vpack.c.b16 %v492, %v488
  %v749 = vpack.c.b16 %v493, %v489
  %v750 = vpack.c.b16 %v494, %v490
  %v751 = vpack.c.b16 %v499, %v495
  %v752 = vpack.c.b16 %v500, %v496
  %v753 = vpack.c.b16 %v501, %v497
  %v754 = vpack.c.b16 %v502, %v498
  %v755 = vpack.c.b16 %v507, %v503
  %v756 = vpack.c.b16 %v508, %v504
  %v757 = vpack.c.b16 %v509, %v505
  %v758 = vpack.c.b16 %v510, %v506
  %v759 = vpack.c.b16 %v515, %v511
  %v760 = vpack.c.b16 %v516, %v512
  %v761 = vpack.c.b16 %v517, %v513
  %v762 = vpack.c.b16 %v518, %v514
  %v763 = vpack.c.b16 %v523, %v519
  %v764 = vpack.c.b16 %v524, %v520
  %v765 = vpack.c.b16 %v525, %v521
  %v766 = vpack.c.b16 %v526, %v522
  %v767 = vpack.c.b16 %v531, %v527
  %v768 = vpack.c.b16 %v532, %v528
  %v769 = vpack.c.b16 %v533, %v529
  %v770 = vpack.c.b16 %v534, %v530
  %v771 = vpack.c.b16 %v539, %v535
  %v772 = vpack.c.b16 %v540, %v536
  %v773 = vpack.c.b16 %v541, %v537
  %v774 = vpack.c.b16 %v542, %v538
  %v775 = vpack.c.b16 %v547, %v543
  %v776 = vpack.c.b16 %v548, %v544
  %v777 = vpack.c.b16 %v549, %v545
  %v778 = vpack.c.b16 %v550, %v546
  %v779 = vpack.c.b16 %v555, %v551
  %v780 = vpack.c.b16 %v556, %v552
  %v781 = vpack.c.b16 %v557, %v553
  %v782 = vpack.c.b16 %v558, %v554
  %v783 = vpack.c.b16 %v563, %v559
  %v784 = vpack.c.b16 %v564, %v560
  %v785 = vpack.c.b16 %v565, %v561
  %v786 = vpack.c.b16 %v566, %v562
  %v787 = vpack.c.b16 %v571, %v567
  %v788 = vpack.c.b16 %v572, %v568
  %v789 = vpack.c.b16 %v573, %v569
  %v790 = vpack.c.b16 %v574, %v570
  %v791 = vpack.c.b16 %v579, %v575
  %v792 = vpack.c.b16 %v580, %v576
  %v793 = vpack.c.b16 %v581, %v577
  %v794 = vpack.c.b16 %v582, %v578
  %v795 = vpack.c.b16 %v587, %v583
  %v796 = vpack.c.b16 %v588, %v584
  %v797 = vpack.c.b16 %v589, %v585
  %v798 = vpack.c.b16 %v590, %v586
  %v799 = vpack.c.b16 %v595, %v591
  %v800 = vpack.c.b16 %v596, %v592
  %v801 = vpack.c.b16 %v597, %v593
  %v802 = vpack.c.b16 %v598, %v594
  %v803 = vpack.c.b16 %v603, %v599
  %v804 = vpack.c.b16 %v604, %v600
  %v805 = vpack.c.b16 %v605, %v601
  %v806 = vpack.c.b16 %v606, %v602
  %v807 = vpack.c.b16 %v611, %v607
  %v808 = vpack.c.b16 %v612, %v608
  %v809 = vpack.c.b16 %v613, %v609
  %v810 = vpack.c.b16 %v614, %v610
  %v811 = vpack.c.b16 %v619, %v615
  %v812 = vpack.c.b16 %v620, %v616
  %v813 = vpack.c.b16 %v621, %v617
  %v814 = vpack.c.b16 %v622, %v618
  %v815 = vpack.c.b16 %v627, %v623
  %v816 = vpack.c.b16 %v628, %v624
  %v817 = vpack.c.b16 %v629, %v625
  %v818 = vpack.c.b16 %v630, %v626
  %v819 = vpack.c.b16 %v635, %v631
  %v820 = vpack.c.b16 %v636, %v632
  %v821 = vpack.c.b16 %v637, %v633
  %v822 = vpack.c.b16 %v638, %v634
  %v823 = vpack.c.b16 %v643, %v639
  %v824 = vpack.c.b16 %v644, %v640
  %v825 = vpack.c.b16 %v645, %v641
  %v826 = vpack.c.b16 %v646, %v642
  %v827 = vpack.c.b16 %v651, %v647
  %v828 = vpack.c.b16 %v652, %v648
  %v829 = vpack.c.b16 %v653, %v649
  %v830 = vpack.c.b16 %v654, %v650
  %v831 = vpack.c.b16 %v659, %v655
  %v832 = vpack.c.b16 %v660, %v656
  %v833 = vpack.c.b16 %v661, %v657
  %v834 = vpack.c.b16 %v662, %v658
  %v835 = vpack.c.b16 %v667, %v663
  %v836 = vpack.c.b16 %v668, %v664
  %v837 = vpack.c.b16 %v669, %v665
  %v838 = vpack.c.b16 %v670, %v666
  %v839 = vpack.c.b16 %v675, %v671
  %v840 = vpack.c.b16 %v676, %v672
  %v841 = vpack.c.b16 %v677, %v673
  %v842 = vpack.c.b16 %v678, %v674
  %v843 = vpack.c.b16 %v683, %v679
  %v844 = vpack.c.b16 %v684, %v680
  %v845 = vpack.c.b16 %v685, %v681
  %v846 = vpack.c.b16 %v686, %v682
  %v847 = vpack.c.b16 %v691, %v687
  %v848 = vpack.c.b16 %v692, %v688
  %v849 = vpack.c.b16 %v693, %v689
  %v850 = vpack.c.b16 %v694, %v690
  %v851 = vpack.c.b16 %v699, %v695
  %v852 = vpack.c.b16 %v700, %v696
  %v853 = vpack.c.b16 %v701, %v697
  %v854 = vpack.c.b16 %v702, %v698
  %v855 = vpack.c.b16 %v707, %v703
  %v856 = vpack.c.b16 %v708, %v704
  %v857 = vpack.c.b16 %v709, %v705
  %v858 = vpack.c.b16 %v710, %v706
  %v859 = vpack.c.b16 %v715, %v711
  %v860 = vpack.c.b16 %v716, %v712
  %v861 = vpack.c.b16 %v717, %v713
  %v862 = vpack.c.b16 %v718, %v714
  %v863 = vpack.c.b16 %v723, %v719
  %v864 = vpack.c.b16 %v724, %v720
  %v865 = vpack.c.b16 %v725, %v721
  %v866 = vpack.c.b16 %v726, %v722
  %v867 = vpack.c.b16 %v731, %v727
  %v868 = vpack.c.b16 %v732, %v728
  %v869 = vpack.c.b16 %v733, %v729
  %v870 = vpack.c.b16 %v734, %v730
  %vm1007 = vcmask 261120
  %v1009 = vsel %vm1007, %v29, 0
  %1011 = vmatprep.subr.bf16.mxu0 %v736
  %1012 = vmatpush1.bf16.msra.mxu0 %v735
  %1013 = vmatprep.subr.bf16.mxu0 %v740
  %1014 = vmatpush1.bf16.msra.mxu0 %v739
  %1015 = vmatprep.subr.bf16.mxu0 %v744
  %1016 = vmatpush1.bf16.msra.mxu0 %v743
  %1017 = vmatprep.subr.bf16.mxu0 %v748
  %1018 = vmatpush1.bf16.msra.mxu0 %v747
  %1019 = vmatprep.subr.bf16.mxu0 %v752
  %1020 = vmatpush1.bf16.msra.mxu0 %v751
  %1021 = vmatprep.subr.bf16.mxu0 %v756
  %1022 = vmatpush1.bf16.msra.mxu0 %v755
  %1023 = vmatprep.subr.bf16.mxu0 %v760
  %1024 = vmatpush1.bf16.msra.mxu0 %v759
  %1025 = vmatprep.subr.bf16.mxu0 %v764
  %1026 = vmatpush1.bf16.msra.mxu0 %v763
  %1027 = vmatprep.subr.bf16.mxu0 %v768
  %1028 = vmatpush1.bf16.msra.mxu0 %v767
  %1029 = vmatprep.subr.bf16.mxu0 %v772
  %1030 = vmatpush1.bf16.msra.mxu0 %v771
  %1031 = vmatprep.subr.bf16.mxu0 %v776
  %1032 = vmatpush1.bf16.msra.mxu0 %v775
  %1033 = vmatprep.subr.bf16.mxu0 %v780
  %1034 = vmatpush1.bf16.msra.mxu0 %v779
  %1035 = vmatprep.subr.bf16.mxu0 %v784
  %1036 = vmatpush1.bf16.msra.mxu0 %v783
  %1037 = vmatprep.subr.bf16.mxu0 %v788
  %1038 = vmatpush1.bf16.msra.mxu0 %v787
  %1039 = vmatprep.subr.bf16.mxu0 %v792
  %1040 = vmatpush1.bf16.msra.mxu0 %v791
  %1041 = vmatprep.subr.bf16.mxu0 %v796
  %1042 = vmatpush1.bf16.msra.mxu0 %v795
  %1043 = vmatprep.mubr.bf16.mxu0 %v26
  %1044 = vmatmul.mubr.bf16.gmra.mrb[0].mxu0 %v25
  %v1045 = vpop.f32.mrb[0].mxu0
  %v1046 = vadd.f32 0.0, %v1045
  %v1047 = vpop.f32.mrb[0].mxu0
  %v1048 = vadd.f32 0.0, %v1047
  %v1049 = vpop.f32.mrb[0].mxu0
  %v1050 = vadd.f32 0.0, %v1049
  %v1051 = vpop.f32.mrb[0].mxu0
  %v1052 = vadd.f32 0.0, %v1051
  %1053 = vdwg.mxu0
  %1054 = vmatprep.subr.bf16.mxu0 %v800
  %1055 = vmatpush1.bf16.msra.mxu0 %v799
  %1056 = vmatprep.subr.bf16.mxu0 %v804
  %1057 = vmatpush1.bf16.msra.mxu0 %v803
  %1058 = vmatprep.subr.bf16.mxu0 %v808
  %1059 = vmatpush1.bf16.msra.mxu0 %v807
  %1060 = vmatprep.subr.bf16.mxu0 %v812
  %1061 = vmatpush1.bf16.msra.mxu0 %v811
  %1062 = vmatprep.subr.bf16.mxu0 %v816
  %1063 = vmatpush1.bf16.msra.mxu0 %v815
  %1064 = vmatprep.subr.bf16.mxu0 %v820
  %1065 = vmatpush1.bf16.msra.mxu0 %v819
  %1066 = vmatprep.subr.bf16.mxu0 %v824
  %1067 = vmatpush1.bf16.msra.mxu0 %v823
  %1068 = vmatprep.subr.bf16.mxu0 %v828
  %1069 = vmatpush1.bf16.msra.mxu0 %v827
  %1070 = vmatprep.subr.bf16.mxu0 %v832
  %1071 = vmatpush1.bf16.msra.mxu0 %v831
  %1072 = vmatprep.subr.bf16.mxu0 %v836
  %1073 = vmatpush1.bf16.msra.mxu0 %v835
  %1074 = vmatprep.subr.bf16.mxu0 %v840
  %1075 = vmatpush1.bf16.msra.mxu0 %v839
  %1076 = vmatprep.subr.bf16.mxu0 %v844
  %1077 = vmatpush1.bf16.msra.mxu0 %v843
  %1078 = vmatprep.subr.bf16.mxu0 %v848
  %1079 = vmatpush1.bf16.msra.mxu0 %v847
  %1080 = vmatprep.subr.bf16.mxu0 %v852
  %1081 = vmatpush1.bf16.msra.mxu0 %v851
  %1082 = vmatprep.subr.bf16.mxu0 %v856
  %1083 = vmatpush1.bf16.msra.mxu0 %v855
  %1084 = vmatprep.subr.bf16.mxu0 %v860
  %1085 = vmatpush1.bf16.msra.mxu0 %v859
  %1086 = vmatprep.mubr.bf16.mxu0 %v28
  %1087 = vmatmul.mubr.bf16.gmra.mrb[0].mxu0 %v27
  %v1088 = vpop.f32.mrb[0].mxu0
  %v1089 = vadd.f32 %v1046, %v1088
  %v1090 = vpop.f32.mrb[0].mxu0
  %v1091 = vadd.f32 %v1048, %v1090
  %v1092 = vpop.f32.mrb[0].mxu0
  %v1093 = vadd.f32 %v1050, %v1092
  %v1094 = vpop.f32.mrb[0].mxu0
  %v1095 = vadd.f32 %v1052, %v1094
  %1096 = vdwg.mxu0
  %1097 = vmatprep.subr.bf16.mxu0 %v864
  %1098 = vmatpush1.bf16.msra.mxu0 %v863
  %1099 = vmatprep.subr.bf16.mxu0 %v868
  %1100 = vmatpush1.bf16.msra.mxu0 %v867
  %1101 = vmatprep.subr.bf16.mxu0 0
  %1102 = vmatpush1.bf16.msra.mxu0 0
  %1103 = vmatprep.subr.bf16.mxu0 0
  %1104 = vmatpush1.bf16.msra.mxu0 0
  %1105 = vmatprep.subr.bf16.mxu0 0
  %1106 = vmatpush1.bf16.msra.mxu0 0
  %1107 = vmatprep.subr.bf16.mxu0 0
  %1108 = vmatpush1.bf16.msra.mxu0 0
  %1109 = vmatprep.subr.bf16.mxu0 0
  %1110 = vmatpush1.bf16.msra.mxu0 0
  %1111 = vmatprep.subr.bf16.mxu0 0
  %1112 = vmatpush1.bf16.msra.mxu0 0
  %1113 = vmatprep.subr.bf16.mxu0 0
  %1114 = vmatpush1.bf16.msra.mxu0 0
  %1115 = vmatprep.subr.bf16.mxu0 0
  %1116 = vmatpush1.bf16.msra.mxu0 0
  %1117 = vmatprep.subr.bf16.mxu0 0
  %1118 = vmatpush1.bf16.msra.mxu0 0
  %1119 = vmatprep.subr.bf16.mxu0 0
  %1120 = vmatpush1.bf16.msra.mxu0 0
  %1121 = vmatprep.subr.bf16.mxu0 0
  %1122 = vmatpush1.bf16.msra.mxu0 0
  %1123 = vmatprep.subr.bf16.mxu0 0
  %1124 = vmatpush1.bf16.msra.mxu0 0
  %1125 = vmatprep.subr.bf16.mxu0 0
  %1126 = vmatpush1.bf16.msra.mxu0 0
  %1127 = vmatprep.subr.bf16.mxu0 0
  %1128 = vmatpush1.bf16.msra.mxu0 0
  %1129 = vmatprep.mubr.bf16.mxu0 0
  %1130 = vmatmul.mubr.bf16.gmra.mrb[0].mxu0 %v1009
  %v1131 = vpop.f32.mrb[0].mxu0
  %v1132 = vadd.f32 %v1089, %v1131
  %v1133 = vpop.f32.mrb[0].mxu0
  %v1134 = vadd.f32 %v1091, %v1133
  %v1135 = vpop.f32.mrb[0].mxu0
  %v1136 = vadd.f32 %v1093, %v1135
  %v1137 = vpop.f32.mrb[0].mxu0
  %v1138 = vadd.f32 %v1095, %v1137
  %1139 = vdwg.mxu0
  %1140 = vmatprep.subr.bf16.mxu0 %v738
  %1141 = vmatpush1.bf16.msra.mxu0 %v737
  %1142 = vmatprep.subr.bf16.mxu0 %v742
  %1143 = vmatpush1.bf16.msra.mxu0 %v741
  %1144 = vmatprep.subr.bf16.mxu0 %v746
  %1145 = vmatpush1.bf16.msra.mxu0 %v745
  %1146 = vmatprep.subr.bf16.mxu0 %v750
  %1147 = vmatpush1.bf16.msra.mxu0 %v749
  %1148 = vmatprep.subr.bf16.mxu0 %v754
  %1149 = vmatpush1.bf16.msra.mxu0 %v753
  %1150 = vmatprep.subr.bf16.mxu0 %v758
  %1151 = vmatpush1.bf16.msra.mxu0 %v757
  %1152 = vmatprep.subr.bf16.mxu0 %v762
  %1153 = vmatpush1.bf16.msra.mxu0 %v761
  %1154 = vmatprep.subr.bf16.mxu0 %v766
  %1155 = vmatpush1.bf16.msra.mxu0 %v765
  %1156 = vmatprep.subr.bf16.mxu0 %v770
  %1157 = vmatpush1.bf16.msra.mxu0 %v769
  %1158 = vmatprep.subr.bf16.mxu0 %v774
  %1159 = vmatpush1.bf16.msra.mxu0 %v773
  %1160 = vmatprep.subr.bf16.mxu0 %v778
  %1161 = vmatpush1.bf16.msra.mxu0 %v777
  %1162 = vmatprep.subr.bf16.mxu0 %v782
  %1163 = vmatpush1.bf16.msra.mxu0 %v781
  %1164 = vmatprep.subr.bf16.mxu0 %v786
  %1165 = vmatpush1.bf16.msra.mxu0 %v785
  %1166 = vmatprep.subr.bf16.mxu0 %v790
  %1167 = vmatpush1.bf16.msra.mxu0 %v789
  %1168 = vmatprep.subr.bf16.mxu0 %v794
  %1169 = vmatpush1.bf16.msra.mxu0 %v793
  %1170 = vmatprep.subr.bf16.mxu0 %v798
  %1171 = vmatpush1.bf16.msra.mxu0 %v797
  %1172 = vmatprep.mubr.bf16.mxu0 %v26
  %1173 = vmatmul.mubr.bf16.gmra.mrb[0].mxu0 %v25
  %v1174 = vpop.f32.mrb[0].mxu0
  %v1175 = vadd.f32 0.0, %v1174
  %v1176 = vpop.f32.mrb[0].mxu0
  %v1177 = vadd.f32 0.0, %v1176
  %v1178 = vpop.f32.mrb[0].mxu0
  %v1179 = vadd.f32 0.0, %v1178
  %v1180 = vpop.f32.mrb[0].mxu0
  %v1181 = vadd.f32 0.0, %v1180
  %1182 = vdwg.mxu0
  %1183 = vmatprep.subr.bf16.mxu0 %v802
  %1184 = vmatpush1.bf16.msra.mxu0 %v801
  %1185 = vmatprep.subr.bf16.mxu0 %v806
  %1186 = vmatpush1.bf16.msra.mxu0 %v805
  %1187 = vmatprep.subr.bf16.mxu0 %v810
  %1188 = vmatpush1.bf16.msra.mxu0 %v809
  %1189 = vmatprep.subr.bf16.mxu0 %v814
  %1190 = vmatpush1.bf16.msra.mxu0 %v813
  %1191 = vmatprep.subr.bf16.mxu0 %v818
  %1192 = vmatpush1.bf16.msra.mxu0 %v817
  %1193 = vmatprep.subr.bf16.mxu0 %v822
  %1194 = vmatpush1.bf16.msra.mxu0 %v821
  %1195 = vmatprep.subr.bf16.mxu0 %v826
  %1196 = vmatpush1.bf16.msra.mxu0 %v825
  %1197 = vmatprep.subr.bf16.mxu0 %v830
  %1198 = vmatpush1.bf16.msra.mxu0 %v829
  %1199 = vmatprep.subr.bf16.mxu0 %v834
  %1200 = vmatpush1.bf16.msra.mxu0 %v833
  %1201 = vmatprep.subr.bf16.mxu0 %v838
  %1202 = vmatpush1.bf16.msra.mxu0 %v837
  %1203 = vmatprep.subr.bf16.mxu0 %v842
  %1204 = vmatpush1.bf16.msra.mxu0 %v841
  %1205 = vmatprep.subr.bf16.mxu0 %v846
  %1206 = vmatpush1.bf16.msra.mxu0 %v845
  %1207 = vmatprep.subr.bf16.mxu0 %v850
  %1208 = vmatpush1.bf16.msra.mxu0 %v849
  %1209 = vmatprep.subr.bf16.mxu0 %v854
  %1210 = vmatpush1.bf16.msra.mxu0 %v853
  %1211 = vmatprep.subr.bf16.mxu0 %v858
  %1212 = vmatpush1.bf16.msra.mxu0 %v857
  %1213 = vmatprep.subr.bf16.mxu0 %v862
  %1214 = vmatpush1.bf16.msra.mxu0 %v861
  %1215 = vmatprep.mubr.bf16.mxu0 %v28
  %1216 = vmatmul.mubr.bf16.gmra.mrb[0].mxu0 %v27
  %v1217 = vpop.f32.mrb[0].mxu0
  %v1218 = vadd.f32 %v1175, %v1217
  %v1219 = vpop.f32.mrb[0].mxu0
  %v1220 = vadd.f32 %v1177, %v1219
  %v1221 = vpop.f32.mrb[0].mxu0
  %v1222 = vadd.f32 %v1179, %v1221
  %v1223 = vpop.f32.mrb[0].mxu0
  %v1224 = vadd.f32 %v1181, %v1223
  %1225 = vdwg.mxu0
  %1226 = vmatprep.subr.bf16.mxu0 %v866
  %1227 = vmatpush1.bf16.msra.mxu0 %v865
  %1228 = vmatprep.subr.bf16.mxu0 %v870
  %1229 = vmatpush1.bf16.msra.mxu0 %v869
  %1230 = vmatprep.subr.bf16.mxu0 0
  %1231 = vmatpush1.bf16.msra.mxu0 0
  %1232 = vmatprep.subr.bf16.mxu0 0
  %1233 = vmatpush1.bf16.msra.mxu0 0
  %1234 = vmatprep.subr.bf16.mxu0 0
  %1235 = vmatpush1.bf16.msra.mxu0 0
  %1236 = vmatprep.subr.bf16.mxu0 0
  %1237 = vmatpush1.bf16.msra.mxu0 0
  %1238 = vmatprep.subr.bf16.mxu0 0
  %1239 = vmatpush1.bf16.msra.mxu0 0
  %1240 = vmatprep.subr.bf16.mxu0 0
  %1241 = vmatpush1.bf16.msra.mxu0 0
  %1242 = vmatprep.subr.bf16.mxu0 0
  %1243 = vmatpush1.bf16.msra.mxu0 0
  %1244 = vmatprep.subr.bf16.mxu0 0
  %1245 = vmatpush1.bf16.msra.mxu0 0
  %1246 = vmatprep.subr.bf16.mxu0 0
  %1247 = vmatpush1.bf16.msra.mxu0 0
  %1248 = vmatprep.subr.bf16.mxu0 0
  %1249 = vmatpush1.bf16.msra.mxu0 0
  %1250 = vmatprep.subr.bf16.mxu0 0
  %1251 = vmatpush1.bf16.msra.mxu0 0
  %1252 = vmatprep.subr.bf16.mxu0 0
  %1253 = vmatpush1.bf16.msra.mxu0 0
  %1254 = vmatprep.subr.bf16.mxu0 0
  %1255 = vmatpush1.bf16.msra.mxu0 0
  %1256 = vmatprep.subr.bf16.mxu0 0
  %1257 = vmatpush1.bf16.msra.mxu0 0
  %1258 = vmatprep.mubr.bf16.mxu0 0
  %1259 = vmatmul.mubr.bf16.gmra.mrb[0].mxu0 %v1009
  %v1260 = vpop.f32.mrb[0].mxu0
  %v1261 = vadd.f32 %v1218, %v1260
  %v1262 = vpop.f32.mrb[0].mxu0
  %v1263 = vadd.f32 %v1220, %v1262
  %v1264 = vpop.f32.mrb[0].mxu0
  %v1265 = vadd.f32 %v1222, %v1264
  %v1266 = vpop.f32.mrb[0].mxu0
  %v1267 = vadd.f32 %v1224, %v1266
  %1268 = vdwg.mxu0
  %v1405 = vunpack.c.l.b16 %v55
  %v1406 = vunpack.c.h.b16 %v55
  %v1407 = vunpack.c.l.b16 %v56
  %v1408 = vunpack.c.h.b16 %v56
  %v1409 = vunpack.c.l.b16 %v57
  %v1410 = vunpack.c.h.b16 %v57
  %v1411 = vunpack.c.l.b16 %v58
  %v1412 = vunpack.c.h.b16 %v58
  %v1413 = vunpack.c.l.b16 %v59
  %v1414 = vunpack.c.h.b16 %v59
  %v1415 = vunpack.c.l.b16 %v60
  %v1416 = vunpack.c.h.b16 %v60
  %v1417 = vunpack.c.l.b16 %v61
  %v1418 = vunpack.c.h.b16 %v61
  %v1419 = vunpack.c.l.b16 %v62
  %v1420 = vunpack.c.h.b16 %v62
  %v1421 = vunpack.c.l.b16 %v63
  %v1422 = vunpack.c.h.b16 %v63
  %v1423 = vunpack.c.l.b16 %v64
  %v1424 = vunpack.c.h.b16 %v64
  %v1425 = vunpack.c.l.b16 %v65
  %v1426 = vunpack.c.h.b16 %v65
  %v1427 = vunpack.c.l.b16 %v66
  %v1428 = vunpack.c.h.b16 %v66
  %v1429 = vunpack.c.l.b16 %v67
  %v1430 = vunpack.c.h.b16 %v67
  %v1431 = vunpack.c.l.b16 %v68
  %v1432 = vunpack.c.h.b16 %v68
  %v1433 = vunpack.c.l.b16 %v69
  %v1434 = vunpack.c.h.b16 %v69
  %v1435 = vunpack.c.l.b16 %v70
  %v1436 = vunpack.c.h.b16 %v70
  %v1437 = vunpack.c.l.b16 %v71
  %v1438 = vunpack.c.h.b16 %v71
  %v1439 = vunpack.c.l.b16 %v72
  %v1440 = vunpack.c.h.b16 %v72
  %v1441 = vunpack.c.l.b16 %v73
  %v1442 = vunpack.c.h.b16 %v73
  %v1443 = vunpack.c.l.b16 %v74
  %v1444 = vunpack.c.h.b16 %v74
  %v1445 = vunpack.c.l.b16 %v75
  %v1446 = vunpack.c.h.b16 %v75
  %v1447 = vunpack.c.l.b16 %v76
  %v1448 = vunpack.c.h.b16 %v76
  %v1449 = vunpack.c.l.b16 %v77
  %v1450 = vunpack.c.h.b16 %v77
  %v1451 = vunpack.c.l.b16 %v78
  %v1452 = vunpack.c.h.b16 %v78
  %v1453 = vunpack.c.l.b16 %v79
  %v1454 = vunpack.c.h.b16 %v79
  %v1455 = vunpack.c.l.b16 %v80
  %v1456 = vunpack.c.h.b16 %v80
  %v1457 = vunpack.c.l.b16 %v81
  %v1458 = vunpack.c.h.b16 %v81
  %v1459 = vunpack.c.l.b16 %v82
  %v1460 = vunpack.c.h.b16 %v82
  %v1461 = vunpack.c.l.b16 %v83
  %v1462 = vunpack.c.h.b16 %v83
  %v1463 = vunpack.c.l.b16 %v84
  %v1464 = vunpack.c.h.b16 %v84
  %v1465 = vunpack.c.l.b16 %v85
  %v1466 = vunpack.c.h.b16 %v85
  %v1467 = vunpack.c.l.b16 %v86
  %v1468 = vunpack.c.h.b16 %v86
  %v1469 = vunpack.c.l.b16 %v87
  %v1470 = vunpack.c.h.b16 %v87
  %v1471 = vunpack.c.l.b16 %v88
  %v1472 = vunpack.c.h.b16 %v88
  %v1473 = vunpack.c.l.b16 %v89
  %v1474 = vunpack.c.h.b16 %v89
  %v1475 = vunpack.c.l.b16 %v90
  %v1476 = vunpack.c.h.b16 %v90
  %v1477 = vunpack.c.l.b16 %v91
  %v1478 = vunpack.c.h.b16 %v91
  %v1479 = vunpack.c.l.b16 %v92
  %v1480 = vunpack.c.h.b16 %v92
  %v1481 = vunpack.c.l.b16 %v93
  %v1482 = vunpack.c.h.b16 %v93
  %v1483 = vunpack.c.l.b16 %v94
  %v1484 = vunpack.c.h.b16 %v94
  %v1485 = vunpack.c.l.b16 %v95
  %v1486 = vunpack.c.h.b16 %v95
  %v1487 = vunpack.c.l.b16 %v96
  %v1488 = vunpack.c.h.b16 %v96
  %v1489 = vunpack.c.l.b16 %v97
  %v1490 = vunpack.c.h.b16 %v97
  %v1491 = vunpack.c.l.b16 %v98
  %v1492 = vunpack.c.h.b16 %v98
  %v1493 = vunpack.c.l.b16 %v99
  %v1494 = vunpack.c.h.b16 %v99
  %v1495 = vunpack.c.l.b16 %v100
  %v1496 = vunpack.c.h.b16 %v100
  %v1497 = vunpack.c.l.b16 %v101
  %v1498 = vunpack.c.h.b16 %v101
  %v1499 = vunpack.c.l.b16 %v102
  %v1500 = vunpack.c.h.b16 %v102
  %v1501 = vunpack.c.l.b16 %v103
  %v1502 = vunpack.c.h.b16 %v103
  %v1503 = vunpack.c.l.b16 %v104
  %v1504 = vunpack.c.h.b16 %v104
  %v1505 = vunpack.c.l.b16 %v105
  %v1506 = vunpack.c.h.b16 %v105
  %v1507 = vunpack.c.l.b16 %v106
  %v1508 = vunpack.c.h.b16 %v106
  %v1509 = vunpack.c.l.b16 %v107
  %v1510 = vunpack.c.h.b16 %v107
  %v1511 = vunpack.c.l.b16 %v108
  %v1512 = vunpack.c.h.b16 %v108
  %v1513 = vunpack.c.l.b16 %v109
  %v1514 = vunpack.c.h.b16 %v109
  %v1515 = vunpack.c.l.b16 %v110
  %v1516 = vunpack.c.h.b16 %v110
  %v1517 = vunpack.c.l.b16 %v111
  %v1518 = vunpack.c.h.b16 %v111
  %v1519 = vunpack.c.l.b16 %v112
  %v1520 = vunpack.c.h.b16 %v112
  %v1521 = vunpack.c.l.b16 %v113
  %v1522 = vunpack.c.h.b16 %v113
  %v1523 = vunpack.c.l.b16 %v114
  %v1524 = vunpack.c.h.b16 %v114
  %v1525 = vunpack.c.l.b16 %v115
  %v1526 = vunpack.c.h.b16 %v115
  %v1527 = vunpack.c.l.b16 %v116
  %v1528 = vunpack.c.h.b16 %v116
  %v1529 = vunpack.c.l.b16 %v117
  %v1530 = vunpack.c.h.b16 %v117
  %v1531 = vunpack.c.l.b16 %v118
  %v1532 = vunpack.c.h.b16 %v118
  %v1533 = vunpack.c.l.b16 %v119
  %v1534 = vunpack.c.h.b16 %v119
  %v1535 = vunpack.c.l.b16 %v120
  %v1536 = vunpack.c.h.b16 %v120
  %v1537 = vunpack.c.l.b16 %v121
  %v1538 = vunpack.c.h.b16 %v121
  %v1539 = vunpack.c.l.b16 %v122
  %v1540 = vunpack.c.h.b16 %v122
  %v1541 = vunpack.c.l.b16 %v123
  %v1542 = vunpack.c.h.b16 %v123
  %v1543 = vunpack.c.l.b16 %v124
  %v1544 = vunpack.c.h.b16 %v124
  %v1545 = vunpack.c.l.b16 %v125
  %v1546 = vunpack.c.h.b16 %v125
  %v1547 = vunpack.c.l.b16 %v126
  %v1548 = vunpack.c.h.b16 %v126
  %v1549 = vunpack.c.l.b16 %v127
  %v1550 = vunpack.c.h.b16 %v127
  %v1551 = vunpack.c.l.b16 %v128
  %v1552 = vunpack.c.h.b16 %v128
  %v1553 = vunpack.c.l.b16 %v129
  %v1554 = vunpack.c.h.b16 %v129
  %v1555 = vunpack.c.l.b16 %v130
  %v1556 = vunpack.c.h.b16 %v130
  %v1557 = vunpack.c.l.b16 %v131
  %v1558 = vunpack.c.h.b16 %v131
  %v1559 = vunpack.c.l.b16 %v132
  %v1560 = vunpack.c.h.b16 %v132
  %v1561 = vunpack.c.l.b16 %v133
  %v1562 = vunpack.c.h.b16 %v133
  %v1563 = vunpack.c.l.b16 %v134
  %v1564 = vunpack.c.h.b16 %v134
  %v1565 = vunpack.c.l.b16 %v135
  %v1566 = vunpack.c.h.b16 %v135
  %v1567 = vunpack.c.l.b16 %v136
  %v1568 = vunpack.c.h.b16 %v136
  %v1569 = vunpack.c.l.b16 %v137
  %v1570 = vunpack.c.h.b16 %v137
  %v1571 = vunpack.c.l.b16 %v138
  %v1572 = vunpack.c.h.b16 %v138
  %v1573 = vunpack.c.l.b16 %v139
  %v1574 = vunpack.c.h.b16 %v139
  %v1575 = vunpack.c.l.b16 %v140
  %v1576 = vunpack.c.h.b16 %v140
  %v1577 = vunpack.c.l.b16 %v141
  %v1578 = vunpack.c.h.b16 %v141
  %v1579 = vunpack.c.l.b16 %v142
  %v1580 = vunpack.c.h.b16 %v142
  %v1581 = vunpack.c.l.b16 %v143
  %v1582 = vunpack.c.h.b16 %v143
  %v1583 = vunpack.c.l.b16 %v144
  %v1584 = vunpack.c.h.b16 %v144
  %v1585 = vunpack.c.l.b16 %v145
  %v1586 = vunpack.c.h.b16 %v145
  %v1587 = vunpack.c.l.b16 %v146
  %v1588 = vunpack.c.h.b16 %v146
  %v1589 = vunpack.c.l.b16 %v147
  %v1590 = vunpack.c.h.b16 %v147
  %v1591 = vunpack.c.l.b16 %v148
  %v1592 = vunpack.c.h.b16 %v148
  %v1593 = vunpack.c.l.b16 %v149
  %v1594 = vunpack.c.h.b16 %v149
  %v1595 = vunpack.c.l.b16 %v150
  %v1596 = vunpack.c.h.b16 %v150
  %v1597 = vunpack.c.l.b16 %v151
  %v1598 = vunpack.c.h.b16 %v151
  %v1599 = vunpack.c.l.b16 %v152
  %v1600 = vunpack.c.h.b16 %v152
  %v1601 = vunpack.c.l.b16 %v153
  %v1602 = vunpack.c.h.b16 %v153
  %v1603 = vunpack.c.l.b16 %v154
  %v1604 = vunpack.c.h.b16 %v154
  %v1605 = vunpack.c.l.b16 %v155
  %v1606 = vunpack.c.h.b16 %v155
  %v1607 = vunpack.c.l.b16 %v156
  %v1608 = vunpack.c.h.b16 %v156
  %v1609 = vunpack.c.l.b16 %v157
  %v1610 = vunpack.c.h.b16 %v157
  %v1611 = vunpack.c.l.b16 %v158
  %v1612 = vunpack.c.h.b16 %v158
  %v1613 = vunpack.c.l.b16 %v159
  %v1614 = vunpack.c.h.b16 %v159
  %v1615 = vunpack.c.l.b16 %v160
  %v1616 = vunpack.c.h.b16 %v160
  %v1617 = vunpack.c.l.b16 %v161
  %v1618 = vunpack.c.h.b16 %v161
  %v1619 = vunpack.c.l.b16 %v162
  %v1620 = vunpack.c.h.b16 %v162
  %v1621 = vunpack.c.l.b16 %v163
  %v1622 = vunpack.c.h.b16 %v163
  %v1623 = vunpack.c.l.b16 %v164
  %v1624 = vunpack.c.h.b16 %v164
  %v1625 = vunpack.c.l.b16 %v165
  %v1626 = vunpack.c.h.b16 %v165
  %v1627 = vunpack.c.l.b16 %v166
  %v1628 = vunpack.c.h.b16 %v166
  %v1629 = vunpack.c.l.b16 %v167
  %v1630 = vunpack.c.h.b16 %v167
  %v1631 = vunpack.c.l.b16 %v168
  %v1632 = vunpack.c.h.b16 %v168
  %v1633 = vunpack.c.l.b16 %v169
  %v1634 = vunpack.c.h.b16 %v169
  %v1635 = vunpack.c.l.b16 %v170
  %v1636 = vunpack.c.h.b16 %v170
  %v1637 = vunpack.c.l.b16 %v171
  %v1638 = vunpack.c.h.b16 %v171
  %v1639 = vunpack.c.l.b16 %v172
  %v1640 = vunpack.c.h.b16 %v172
  %v1641 = vunpack.c.l.b16 %v173
  %v1642 = vunpack.c.h.b16 %v173
  %v1643 = vunpack.c.l.b16 %v174
  %v1644 = vunpack.c.h.b16 %v174
  %v1645 = vunpack.c.l.b16 %v175
  %v1646 = vunpack.c.h.b16 %v175
  %v1647 = vunpack.c.l.b16 %v176
  %v1648 = vunpack.c.h.b16 %v176
  %v1649 = vunpack.c.l.b16 %v177
  %v1650 = vunpack.c.h.b16 %v177
  %v1651 = vunpack.c.l.b16 %v178
  %v1652 = vunpack.c.h.b16 %v178
  %v1653 = vunpack.c.l.b16 %v179
  %v1654 = vunpack.c.h.b16 %v179
  %v1655 = vunpack.c.l.b16 %v180
  %v1656 = vunpack.c.h.b16 %v180
  %v1657 = vunpack.c.l.b16 %v181
  %v1658 = vunpack.c.h.b16 %v181
  %v1659 = vunpack.c.l.b16 %v182
  %v1660 = vunpack.c.h.b16 %v182
  %v1661 = vunpack.c.l.b16 %v183
  %v1662 = vunpack.c.h.b16 %v183
  %v1663 = vunpack.c.l.b16 %v184
  %v1664 = vunpack.c.h.b16 %v184
  %v1665 = vunpack.c.l.b16 %v185
  %v1666 = vunpack.c.h.b16 %v185
  %v1667 = vunpack.c.l.b16 %v186
  %v1668 = vunpack.c.h.b16 %v186
  %v1669 = vunpack.c.l.b16 %v187
  %v1670 = vunpack.c.h.b16 %v187
  %v1671 = vunpack.c.l.b16 %v188
  %v1672 = vunpack.c.h.b16 %v188
  %v1673 = vunpack.c.l.b16 %v189
  %v1674 = vunpack.c.h.b16 %v189
  %v1675 = vunpack.c.l.b16 %v190
  %v1676 = vunpack.c.h.b16 %v190
  %v1677 = vpack.c.b16 %v1409, %v1405
  %v1678 = vpack.c.b16 %v1410, %v1406
  %v1679 = vpack.c.b16 %v1411, %v1407
  %v1680 = vpack.c.b16 %v1412, %v1408
  %v1681 = vpack.c.b16 %v1417, %v1413
  %v1682 = vpack.c.b16 %v1418, %v1414
  %v1683 = vpack.c.b16 %v1419, %v1415
  %v1684 = vpack.c.b16 %v1420, %v1416
  %v1685 = vpack.c.b16 %v1425, %v1421
  %v1686 = vpack.c.b16 %v1426, %v1422
  %v1687 = vpack.c.b16 %v1427, %v1423
  %v1688 = vpack.c.b16 %v1428, %v1424
  %v1689 = vpack.c.b16 %v1433, %v1429
  %v1690 = vpack.c.b16 %v1434, %v1430
  %v1691 = vpack.c.b16 %v1435, %v1431
  %v1692 = vpack.c.b16 %v1436, %v1432
  %v1693 = vpack.c.b16 %v1441, %v1437
  %v1694 = vpack.c.b16 %v1442, %v1438
  %v1695 = vpack.c.b16 %v1443, %v1439
  %v1696 = vpack.c.b16 %v1444, %v1440
  %v1697 = vpack.c.b16 %v1449, %v1445
  %v1698 = vpack.c.b16 %v1450, %v1446
  %v1699 = vpack.c.b16 %v1451, %v1447
  %v1700 = vpack.c.b16 %v1452, %v1448
  %v1701 = vpack.c.b16 %v1457, %v1453
  %v1702 = vpack.c.b16 %v1458, %v1454
  %v1703 = vpack.c.b16 %v1459, %v1455
  %v1704 = vpack.c.b16 %v1460, %v1456
  %v1705 = vpack.c.b16 %v1465, %v1461
  %v1706 = vpack.c.b16 %v1466, %v1462
  %v1707 = vpack.c.b16 %v1467, %v1463
  %v1708 = vpack.c.b16 %v1468, %v1464
  %v1709 = vpack.c.b16 %v1473, %v1469
  %v1710 = vpack.c.b16 %v1474, %v1470
  %v1711 = vpack.c.b16 %v1475, %v1471
  %v1712 = vpack.c.b16 %v1476, %v1472
  %v1713 = vpack.c.b16 %v1481, %v1477
  %v1714 = vpack.c.b16 %v1482, %v1478
  %v1715 = vpack.c.b16 %v1483, %v1479
  %v1716 = vpack.c.b16 %v1484, %v1480
  %v1717 = vpack.c.b16 %v1489, %v1485
  %v1718 = vpack.c.b16 %v1490, %v1486
  %v1719 = vpack.c.b16 %v1491, %v1487
  %v1720 = vpack.c.b16 %v1492, %v1488
  %v1721 = vpack.c.b16 %v1497, %v1493
  %v1722 = vpack.c.b16 %v1498, %v1494
  %v1723 = vpack.c.b16 %v1499, %v1495
  %v1724 = vpack.c.b16 %v1500, %v1496
  %v1725 = vpack.c.b16 %v1505, %v1501
  %v1726 = vpack.c.b16 %v1506, %v1502
  %v1727 = vpack.c.b16 %v1507, %v1503
  %v1728 = vpack.c.b16 %v1508, %v1504
  %v1729 = vpack.c.b16 %v1513, %v1509
  %v1730 = vpack.c.b16 %v1514, %v1510
  %v1731 = vpack.c.b16 %v1515, %v1511
  %v1732 = vpack.c.b16 %v1516, %v1512
  %v1733 = vpack.c.b16 %v1521, %v1517
  %v1734 = vpack.c.b16 %v1522, %v1518
  %v1735 = vpack.c.b16 %v1523, %v1519
  %v1736 = vpack.c.b16 %v1524, %v1520
  %v1737 = vpack.c.b16 %v1529, %v1525
  %v1738 = vpack.c.b16 %v1530, %v1526
  %v1739 = vpack.c.b16 %v1531, %v1527
  %v1740 = vpack.c.b16 %v1532, %v1528
  %v1741 = vpack.c.b16 %v1537, %v1533
  %v1742 = vpack.c.b16 %v1538, %v1534
  %v1743 = vpack.c.b16 %v1539, %v1535
  %v1744 = vpack.c.b16 %v1540, %v1536
  %v1745 = vpack.c.b16 %v1545, %v1541
  %v1746 = vpack.c.b16 %v1546, %v1542
  %v1747 = vpack.c.b16 %v1547, %v1543
  %v1748 = vpack.c.b16 %v1548, %v1544
  %v1749 = vpack.c.b16 %v1553, %v1549
  %v1750 = vpack.c.b16 %v1554, %v1550
  %v1751 = vpack.c.b16 %v1555, %v1551
  %v1752 = vpack.c.b16 %v1556, %v1552
  %v1753 = vpack.c.b16 %v1561, %v1557
  %v1754 = vpack.c.b16 %v1562, %v1558
  %v1755 = vpack.c.b16 %v1563, %v1559
  %v1756 = vpack.c.b16 %v1564, %v1560
  %v1757 = vpack.c.b16 %v1569, %v1565
  %v1758 = vpack.c.b16 %v1570, %v1566
  %v1759 = vpack.c.b16 %v1571, %v1567
  %v1760 = vpack.c.b16 %v1572, %v1568
  %v1761 = vpack.c.b16 %v1577, %v1573
  %v1762 = vpack.c.b16 %v1578, %v1574
  %v1763 = vpack.c.b16 %v1579, %v1575
  %v1764 = vpack.c.b16 %v1580, %v1576
  %v1765 = vpack.c.b16 %v1585, %v1581
  %v1766 = vpack.c.b16 %v1586, %v1582
  %v1767 = vpack.c.b16 %v1587, %v1583
  %v1768 = vpack.c.b16 %v1588, %v1584
  %v1769 = vpack.c.b16 %v1593, %v1589
  %v1770 = vpack.c.b16 %v1594, %v1590
  %v1771 = vpack.c.b16 %v1595, %v1591
  %v1772 = vpack.c.b16 %v1596, %v1592
  %v1773 = vpack.c.b16 %v1601, %v1597
  %v1774 = vpack.c.b16 %v1602, %v1598
  %v1775 = vpack.c.b16 %v1603, %v1599
  %v1776 = vpack.c.b16 %v1604, %v1600
  %v1777 = vpack.c.b16 %v1609, %v1605
  %v1778 = vpack.c.b16 %v1610, %v1606
  %v1779 = vpack.c.b16 %v1611, %v1607
  %v1780 = vpack.c.b16 %v1612, %v1608
  %v1781 = vpack.c.b16 %v1617, %v1613
  %v1782 = vpack.c.b16 %v1618, %v1614
  %v1783 = vpack.c.b16 %v1619, %v1615
  %v1784 = vpack.c.b16 %v1620, %v1616
  %v1785 = vpack.c.b16 %v1625, %v1621
  %v1786 = vpack.c.b16 %v1626, %v1622
  %v1787 = vpack.c.b16 %v1627, %v1623
  %v1788 = vpack.c.b16 %v1628, %v1624
  %v1789 = vpack.c.b16 %v1633, %v1629
  %v1790 = vpack.c.b16 %v1634, %v1630
  %v1791 = vpack.c.b16 %v1635, %v1631
  %v1792 = vpack.c.b16 %v1636, %v1632
  %v1793 = vpack.c.b16 %v1641, %v1637
  %v1794 = vpack.c.b16 %v1642, %v1638
  %v1795 = vpack.c.b16 %v1643, %v1639
  %v1796 = vpack.c.b16 %v1644, %v1640
  %v1797 = vpack.c.b16 %v1649, %v1645
  %v1798 = vpack.c.b16 %v1650, %v1646
  %v1799 = vpack.c.b16 %v1651, %v1647
  %v1800 = vpack.c.b16 %v1652, %v1648
  %v1801 = vpack.c.b16 %v1657, %v1653
  %v1802 = vpack.c.b16 %v1658, %v1654
  %v1803 = vpack.c.b16 %v1659, %v1655
  %v1804 = vpack.c.b16 %v1660, %v1656
  %v1805 = vpack.c.b16 %v1665, %v1661
  %v1806 = vpack.c.b16 %v1666, %v1662
  %v1807 = vpack.c.b16 %v1667, %v1663
  %v1808 = vpack.c.b16 %v1668, %v1664
  %v1809 = vpack.c.b16 %v1673, %v1669
  %v1810 = vpack.c.b16 %v1674, %v1670
  %v1811 = vpack.c.b16 %v1675, %v1671
  %v1812 = vpack.c.b16 %v1676, %v1672
  %1949 = vmatprep.subr.bf16.mxu0 %v1678
  %1950 = vmatpush1.bf16.msra.mxu0 %v1677
  %1951 = vmatprep.subr.bf16.mxu0 %v1682
  %1952 = vmatpush1.bf16.msra.mxu0 %v1681
  %1953 = vmatprep.subr.bf16.mxu0 %v1686
  %1954 = vmatpush1.bf16.msra.mxu0 %v1685
  %1955 = vmatprep.subr.bf16.mxu0 %v1690
  %1956 = vmatpush1.bf16.msra.mxu0 %v1689
  %1957 = vmatprep.subr.bf16.mxu0 %v1694
  %1958 = vmatpush1.bf16.msra.mxu0 %v1693
  %1959 = vmatprep.subr.bf16.mxu0 %v1698
  %1960 = vmatpush1.bf16.msra.mxu0 %v1697
  %1961 = vmatprep.subr.bf16.mxu0 %v1702
  %1962 = vmatpush1.bf16.msra.mxu0 %v1701
  %1963 = vmatprep.subr.bf16.mxu0 %v1706
  %1964 = vmatpush1.bf16.msra.mxu0 %v1705
  %1965 = vmatprep.subr.bf16.mxu0 %v1710
  %1966 = vmatpush1.bf16.msra.mxu0 %v1709
  %1967 = vmatprep.subr.bf16.mxu0 %v1714
  %1968 = vmatpush1.bf16.msra.mxu0 %v1713
  %1969 = vmatprep.subr.bf16.mxu0 %v1718
  %1970 = vmatpush1.bf16.msra.mxu0 %v1717
  %1971 = vmatprep.subr.bf16.mxu0 %v1722
  %1972 = vmatpush1.bf16.msra.mxu0 %v1721
  %1973 = vmatprep.subr.bf16.mxu0 %v1726
  %1974 = vmatpush1.bf16.msra.mxu0 %v1725
  %1975 = vmatprep.subr.bf16.mxu0 %v1730
  %1976 = vmatpush1.bf16.msra.mxu0 %v1729
  %1977 = vmatprep.subr.bf16.mxu0 %v1734
  %1978 = vmatpush1.bf16.msra.mxu0 %v1733
  %1979 = vmatprep.subr.bf16.mxu0 %v1738
  %1980 = vmatpush1.bf16.msra.mxu0 %v1737
  %1981 = vmatprep.mubr.bf16.mxu0 %v26
  %1982 = vmatmul.mubr.bf16.gmra.mrb[0].mxu0 %v25
  %v1983 = vpop.f32.mrb[0].mxu0
  %v1984 = vadd.f32 %v1132, %v1983
  %v1985 = vpop.f32.mrb[0].mxu0
  %v1986 = vadd.f32 %v1134, %v1985
  %v1987 = vpop.f32.mrb[0].mxu0
  %v1988 = vadd.f32 %v1136, %v1987
  %v1989 = vpop.f32.mrb[0].mxu0
  %v1990 = vadd.f32 %v1138, %v1989
  %1991 = vdwg.mxu0
  %1992 = vmatprep.subr.bf16.mxu0 %v1742
  %1993 = vmatpush1.bf16.msra.mxu0 %v1741
  %1994 = vmatprep.subr.bf16.mxu0 %v1746
  %1995 = vmatpush1.bf16.msra.mxu0 %v1745
  %1996 = vmatprep.subr.bf16.mxu0 %v1750
  %1997 = vmatpush1.bf16.msra.mxu0 %v1749
  %1998 = vmatprep.subr.bf16.mxu0 %v1754
  %1999 = vmatpush1.bf16.msra.mxu0 %v1753
  %2000 = vmatprep.subr.bf16.mxu0 %v1758
  %2001 = vmatpush1.bf16.msra.mxu0 %v1757
  %2002 = vmatprep.subr.bf16.mxu0 %v1762
  %2003 = vmatpush1.bf16.msra.mxu0 %v1761
  %2004 = vmatprep.subr.bf16.mxu0 %v1766
  %2005 = vmatpush1.bf16.msra.mxu0 %v1765
  %2006 = vmatprep.subr.bf16.mxu0 %v1770
  %2007 = vmatpush1.bf16.msra.mxu0 %v1769
  %2008 = vmatprep.subr.bf16.mxu0 %v1774
  %2009 = vmatpush1.bf16.msra.mxu0 %v1773
  %2010 = vmatprep.subr.bf16.mxu0 %v1778
  %2011 = vmatpush1.bf16.msra.mxu0 %v1777
  %2012 = vmatprep.subr.bf16.mxu0 %v1782
  %2013 = vmatpush1.bf16.msra.mxu0 %v1781
  %2014 = vmatprep.subr.bf16.mxu0 %v1786
  %2015 = vmatpush1.bf16.msra.mxu0 %v1785
  %2016 = vmatprep.subr.bf16.mxu0 %v1790
  %2017 = vmatpush1.bf16.msra.mxu0 %v1789
  %2018 = vmatprep.subr.bf16.mxu0 %v1794
  %2019 = vmatpush1.bf16.msra.mxu0 %v1793
  %2020 = vmatprep.subr.bf16.mxu0 %v1798
  %2021 = vmatpush1.bf16.msra.mxu0 %v1797
  %2022 = vmatprep.subr.bf16.mxu0 %v1802
  %2023 = vmatpush1.bf16.msra.mxu0 %v1801
  %2024 = vmatprep.mubr.bf16.mxu0 %v28
  %2025 = vmatmul.mubr.bf16.gmra.mrb[0].mxu0 %v27
  %v2026 = vpop.f32.mrb[0].mxu0
  %v2027 = vadd.f32 %v1984, %v2026
  %v2028 = vpop.f32.mrb[0].mxu0
  %v2029 = vadd.f32 %v1986, %v2028
  %v2030 = vpop.f32.mrb[0].mxu0
  %v2031 = vadd.f32 %v1988, %v2030
  %v2032 = vpop.f32.mrb[0].mxu0
  %v2033 = vadd.f32 %v1990, %v2032
  %2034 = vdwg.mxu0
  %2035 = vmatprep.subr.bf16.mxu0 %v1806
  %2036 = vmatpush1.bf16.msra.mxu0 %v1805
  %2037 = vmatprep.subr.bf16.mxu0 %v1810
  %2038 = vmatpush1.bf16.msra.mxu0 %v1809
  %2039 = vmatprep.subr.bf16.mxu0 0
  %2040 = vmatpush1.bf16.msra.mxu0 0
  %2041 = vmatprep.subr.bf16.mxu0 0
  %2042 = vmatpush1.bf16.msra.mxu0 0
  %2043 = vmatprep.subr.bf16.mxu0 0
  %2044 = vmatpush1.bf16.msra.mxu0 0
  %2045 = vmatprep.subr.bf16.mxu0 0
  %2046 = vmatpush1.bf16.msra.mxu0 0
  %2047 = vmatprep.subr.bf16.mxu0 0
  %2048 = vmatpush1.bf16.msra.mxu0 0
  %2049 = vmatprep.subr.bf16.mxu0 0
  %2050 = vmatpush1.bf16.msra.mxu0 0
  %2051 = vmatprep.subr.bf16.mxu0 0
  %2052 = vmatpush1.bf16.msra.mxu0 0
  %2053 = vmatprep.subr.bf16.mxu0 0
  %2054 = vmatpush1.bf16.msra.mxu0 0
  %2055 = vmatprep.subr.bf16.mxu0 0
  %2056 = vmatpush1.bf16.msra.mxu0 0
  %2057 = vmatprep.subr.bf16.mxu0 0
  %2058 = vmatpush1.bf16.msra.mxu0 0
  %2059 = vmatprep.subr.bf16.mxu0 0
  %2060 = vmatpush1.bf16.msra.mxu0 0
  %2061 = vmatprep.subr.bf16.mxu0 0
  %2062 = vmatpush1.bf16.msra.mxu0 0
  %2063 = vmatprep.subr.bf16.mxu0 0
  %2064 = vmatpush1.bf16.msra.mxu0 0
  %2065 = vmatprep.subr.bf16.mxu0 0
  %2066 = vmatpush1.bf16.msra.mxu0 0
  %2067 = vmatprep.mubr.bf16.mxu0 0
  %2068 = vmatmul.mubr.bf16.gmra.mrb[0].mxu0 %v1009
  %v2069 = vpop.f32.mrb[0].mxu0
  %v2070 = vadd.f32 %v2027, %v2069
  %v2071 = vpop.f32.mrb[0].mxu0
  %v2072 = vadd.f32 %v2029, %v2071
  %v2073 = vpop.f32.mrb[0].mxu0
  %v2074 = vadd.f32 %v2031, %v2073
  %v2075 = vpop.f32.mrb[0].mxu0
  %v2076 = vadd.f32 %v2033, %v2075
  %2077 = vdwg.mxu0
  %2078 = vmatprep.subr.bf16.mxu0 %v1680
  %2079 = vmatpush1.bf16.msra.mxu0 %v1679
  %2080 = vmatprep.subr.bf16.mxu0 %v1684
  %2081 = vmatpush1.bf16.msra.mxu0 %v1683
  %2082 = vmatprep.subr.bf16.mxu0 %v1688
  %2083 = vmatpush1.bf16.msra.mxu0 %v1687
  %2084 = vmatprep.subr.bf16.mxu0 %v1692
  %2085 = vmatpush1.bf16.msra.mxu0 %v1691
  %2086 = vmatprep.subr.bf16.mxu0 %v1696
  %2087 = vmatpush1.bf16.msra.mxu0 %v1695
  %2088 = vmatprep.subr.bf16.mxu0 %v1700
  %2089 = vmatpush1.bf16.msra.mxu0 %v1699
  %2090 = vmatprep.subr.bf16.mxu0 %v1704
  %2091 = vmatpush1.bf16.msra.mxu0 %v1703
  %2092 = vmatprep.subr.bf16.mxu0 %v1708
  %2093 = vmatpush1.bf16.msra.mxu0 %v1707
  %2094 = vmatprep.subr.bf16.mxu0 %v1712
  %2095 = vmatpush1.bf16.msra.mxu0 %v1711
  %2096 = vmatprep.subr.bf16.mxu0 %v1716
  %2097 = vmatpush1.bf16.msra.mxu0 %v1715
  %2098 = vmatprep.subr.bf16.mxu0 %v1720
  %2099 = vmatpush1.bf16.msra.mxu0 %v1719
  %2100 = vmatprep.subr.bf16.mxu0 %v1724
  %2101 = vmatpush1.bf16.msra.mxu0 %v1723
  %2102 = vmatprep.subr.bf16.mxu0 %v1728
  %2103 = vmatpush1.bf16.msra.mxu0 %v1727
  %2104 = vmatprep.subr.bf16.mxu0 %v1732
  %2105 = vmatpush1.bf16.msra.mxu0 %v1731
  %2106 = vmatprep.subr.bf16.mxu0 %v1736
  %2107 = vmatpush1.bf16.msra.mxu0 %v1735
  %2108 = vmatprep.subr.bf16.mxu0 %v1740
  %2109 = vmatpush1.bf16.msra.mxu0 %v1739
  %2110 = vmatprep.mubr.bf16.mxu0 %v26
  %2111 = vmatmul.mubr.bf16.gmra.mrb[0].mxu0 %v25
  %v2112 = vpop.f32.mrb[0].mxu0
  %v2113 = vadd.f32 %v1261, %v2112
  %v2114 = vpop.f32.mrb[0].mxu0
  %v2115 = vadd.f32 %v1263, %v2114
  %v2116 = vpop.f32.mrb[0].mxu0
  %v2117 = vadd.f32 %v1265, %v2116
  %v2118 = vpop.f32.mrb[0].mxu0
  %v2119 = vadd.f32 %v1267, %v2118
  %2120 = vdwg.mxu0
  %2121 = vmatprep.subr.bf16.mxu0 %v1744
  %2122 = vmatpush1.bf16.msra.mxu0 %v1743
  %2123 = vmatprep.subr.bf16.mxu0 %v1748
  %2124 = vmatpush1.bf16.msra.mxu0 %v1747
  %2125 = vmatprep.subr.bf16.mxu0 %v1752
  %2126 = vmatpush1.bf16.msra.mxu0 %v1751
  %2127 = vmatprep.subr.bf16.mxu0 %v1756
  %2128 = vmatpush1.bf16.msra.mxu0 %v1755
  %2129 = vmatprep.subr.bf16.mxu0 %v1760
  %2130 = vmatpush1.bf16.msra.mxu0 %v1759
  %2131 = vmatprep.subr.bf16.mxu0 %v1764
  %2132 = vmatpush1.bf16.msra.mxu0 %v1763
  %2133 = vmatprep.subr.bf16.mxu0 %v1768
  %2134 = vmatpush1.bf16.msra.mxu0 %v1767
  %2135 = vmatprep.subr.bf16.mxu0 %v1772
  %2136 = vmatpush1.bf16.msra.mxu0 %v1771
  %2137 = vmatprep.subr.bf16.mxu0 %v1776
  %2138 = vmatpush1.bf16.msra.mxu0 %v1775
  %2139 = vmatprep.subr.bf16.mxu0 %v1780
  %2140 = vmatpush1.bf16.msra.mxu0 %v1779
  %2141 = vmatprep.subr.bf16.mxu0 %v1784
  %2142 = vmatpush1.bf16.msra.mxu0 %v1783
  %2143 = vmatprep.subr.bf16.mxu0 %v1788
  %2144 = vmatpush1.bf16.msra.mxu0 %v1787
  %2145 = vmatprep.subr.bf16.mxu0 %v1792
  %2146 = vmatpush1.bf16.msra.mxu0 %v1791
  %2147 = vmatprep.subr.bf16.mxu0 %v1796
  %2148 = vmatpush1.bf16.msra.mxu0 %v1795
  %2149 = vmatprep.subr.bf16.mxu0 %v1800
  %2150 = vmatpush1.bf16.msra.mxu0 %v1799
  %2151 = vmatprep.subr.bf16.mxu0 %v1804
  %2152 = vmatpush1.bf16.msra.mxu0 %v1803
  %2153 = vmatprep.mubr.bf16.mxu0 %v28
  %2154 = vmatmul.mubr.bf16.gmra.mrb[0].mxu0 %v27
  %v2155 = vpop.f32.mrb[0].mxu0
  %v2156 = vadd.f32 %v2113, %v2155
  %v2157 = vpop.f32.mrb[0].mxu0
  %v2158 = vadd.f32 %v2115, %v2157
  %v2159 = vpop.f32.mrb[0].mxu0
  %v2160 = vadd.f32 %v2117, %v2159
  %v2161 = vpop.f32.mrb[0].mxu0
  %v2162 = vadd.f32 %v2119, %v2161
  %2163 = vdwg.mxu0
  %2164 = vmatprep.subr.bf16.mxu0 %v1808
  %2165 = vmatpush1.bf16.msra.mxu0 %v1807
  %2166 = vmatprep.subr.bf16.mxu0 %v1812
  %2167 = vmatpush1.bf16.msra.mxu0 %v1811
  %2168 = vmatprep.subr.bf16.mxu0 0
  %2169 = vmatpush1.bf16.msra.mxu0 0
  %2170 = vmatprep.subr.bf16.mxu0 0
  %2171 = vmatpush1.bf16.msra.mxu0 0
  %2172 = vmatprep.subr.bf16.mxu0 0
  %2173 = vmatpush1.bf16.msra.mxu0 0
  %2174 = vmatprep.subr.bf16.mxu0 0
  %2175 = vmatpush1.bf16.msra.mxu0 0
  %2176 = vmatprep.subr.bf16.mxu0 0
  %2177 = vmatpush1.bf16.msra.mxu0 0
  %2178 = vmatprep.subr.bf16.mxu0 0
  %2179 = vmatpush1.bf16.msra.mxu0 0
  %2180 = vmatprep.subr.bf16.mxu0 0
  %2181 = vmatpush1.bf16.msra.mxu0 0
  %2182 = vmatprep.subr.bf16.mxu0 0
  %2183 = vmatpush1.bf16.msra.mxu0 0
  %2184 = vmatprep.subr.bf16.mxu0 0
  %2185 = vmatpush1.bf16.msra.mxu0 0
  %2186 = vmatprep.subr.bf16.mxu0 0
  %2187 = vmatpush1.bf16.msra.mxu0 0
  %2188 = vmatprep.subr.bf16.mxu0 0
  %2189 = vmatpush1.bf16.msra.mxu0 0
  %2190 = vmatprep.subr.bf16.mxu0 0
  %2191 = vmatpush1.bf16.msra.mxu0 0
  %2192 = vmatprep.subr.bf16.mxu0 0
  %2193 = vmatpush1.bf16.msra.mxu0 0
  %2194 = vmatprep.subr.bf16.mxu0 0
  %2195 = vmatpush1.bf16.msra.mxu0 0
  %2196 = vmatprep.mubr.bf16.mxu0 0
  %2197 = vmatmul.mubr.bf16.gmra.mrb[0].mxu0 %v1009
  %v2198 = vpop.f32.mrb[0].mxu0
  %v2199 = vadd.f32 %v2156, %v2198
  %v2200 = vpop.f32.mrb[0].mxu0
  %v2201 = vadd.f32 %v2158, %v2200
  %v2202 = vpop.f32.mrb[0].mxu0
  %v2203 = vadd.f32 %v2160, %v2202
  %v2204 = vpop.f32.mrb[0].mxu0
  %v2205 = vadd.f32 %v2162, %v2204
  %2206 = vdwg.mxu0
  %v2208 = vsel %vm1007, %v54, 0
  %2210 = vmatprep.subr.bf16.mxu0 %v1678
  %2211 = vmatpush1.bf16.msra.mxu0 %v1677
  %2212 = vmatprep.subr.bf16.mxu0 %v1682
  %2213 = vmatpush1.bf16.msra.mxu0 %v1681
  %2214 = vmatprep.subr.bf16.mxu0 %v1686
  %2215 = vmatpush1.bf16.msra.mxu0 %v1685
  %2216 = vmatprep.subr.bf16.mxu0 %v1690
  %2217 = vmatpush1.bf16.msra.mxu0 %v1689
  %2218 = vmatprep.subr.bf16.mxu0 %v1694
  %2219 = vmatpush1.bf16.msra.mxu0 %v1693
  %2220 = vmatprep.subr.bf16.mxu0 %v1698
  %2221 = vmatpush1.bf16.msra.mxu0 %v1697
  %2222 = vmatprep.subr.bf16.mxu0 %v1702
  %2223 = vmatpush1.bf16.msra.mxu0 %v1701
  %2224 = vmatprep.subr.bf16.mxu0 %v1706
  %2225 = vmatpush1.bf16.msra.mxu0 %v1705
  %2226 = vmatprep.subr.bf16.mxu0 %v1710
  %2227 = vmatpush1.bf16.msra.mxu0 %v1709
  %2228 = vmatprep.subr.bf16.mxu0 %v1714
  %2229 = vmatpush1.bf16.msra.mxu0 %v1713
  %2230 = vmatprep.subr.bf16.mxu0 %v1718
  %2231 = vmatpush1.bf16.msra.mxu0 %v1717
  %2232 = vmatprep.subr.bf16.mxu0 %v1722
  %2233 = vmatpush1.bf16.msra.mxu0 %v1721
  %2234 = vmatprep.subr.bf16.mxu0 %v1726
  %2235 = vmatpush1.bf16.msra.mxu0 %v1725
  %2236 = vmatprep.subr.bf16.mxu0 %v1730
  %2237 = vmatpush1.bf16.msra.mxu0 %v1729
  %2238 = vmatprep.subr.bf16.mxu0 %v1734
  %2239 = vmatpush1.bf16.msra.mxu0 %v1733
  %2240 = vmatprep.subr.bf16.mxu0 %v1738
  %2241 = vmatpush1.bf16.msra.mxu0 %v1737
  %2242 = vmatprep.mubr.bf16.mxu0 %v51
  %2243 = vmatmul.mubr.bf16.gmra.mrb[0].mxu0 %v50
  %v2244 = vpop.f32.mrb[0].mxu0
  %v2245 = vadd.f32 0.0, %v2244
  %v2246 = vpop.f32.mrb[0].mxu0
  %v2247 = vadd.f32 0.0, %v2246
  %v2248 = vpop.f32.mrb[0].mxu0
  %v2249 = vadd.f32 0.0, %v2248
  %v2250 = vpop.f32.mrb[0].mxu0
  %v2251 = vadd.f32 0.0, %v2250
  %2252 = vdwg.mxu0
  %2253 = vmatprep.subr.bf16.mxu0 %v1742
  %2254 = vmatpush1.bf16.msra.mxu0 %v1741
  %2255 = vmatprep.subr.bf16.mxu0 %v1746
  %2256 = vmatpush1.bf16.msra.mxu0 %v1745
  %2257 = vmatprep.subr.bf16.mxu0 %v1750
  %2258 = vmatpush1.bf16.msra.mxu0 %v1749
  %2259 = vmatprep.subr.bf16.mxu0 %v1754
  %2260 = vmatpush1.bf16.msra.mxu0 %v1753
  %2261 = vmatprep.subr.bf16.mxu0 %v1758
  %2262 = vmatpush1.bf16.msra.mxu0 %v1757
  %2263 = vmatprep.subr.bf16.mxu0 %v1762
  %2264 = vmatpush1.bf16.msra.mxu0 %v1761
  %2265 = vmatprep.subr.bf16.mxu0 %v1766
  %2266 = vmatpush1.bf16.msra.mxu0 %v1765
  %2267 = vmatprep.subr.bf16.mxu0 %v1770
  %2268 = vmatpush1.bf16.msra.mxu0 %v1769
  %2269 = vmatprep.subr.bf16.mxu0 %v1774
  %2270 = vmatpush1.bf16.msra.mxu0 %v1773
  %2271 = vmatprep.subr.bf16.mxu0 %v1778
  %2272 = vmatpush1.bf16.msra.mxu0 %v1777
  %2273 = vmatprep.subr.bf16.mxu0 %v1782
  %2274 = vmatpush1.bf16.msra.mxu0 %v1781
  %2275 = vmatprep.subr.bf16.mxu0 %v1786
  %2276 = vmatpush1.bf16.msra.mxu0 %v1785
  %2277 = vmatprep.subr.bf16.mxu0 %v1790
  %2278 = vmatpush1.bf16.msra.mxu0 %v1789
  %2279 = vmatprep.subr.bf16.mxu0 %v1794
  %2280 = vmatpush1.bf16.msra.mxu0 %v1793
  %2281 = vmatprep.subr.bf16.mxu0 %v1798
  %2282 = vmatpush1.bf16.msra.mxu0 %v1797
  %2283 = vmatprep.subr.bf16.mxu0 %v1802
  %2284 = vmatpush1.bf16.msra.mxu0 %v1801
  %2285 = vmatprep.mubr.bf16.mxu0 %v53
  %2286 = vmatmul.mubr.bf16.gmra.mrb[0].mxu0 %v52
  %v2287 = vpop.f32.mrb[0].mxu0
  %v2288 = vadd.f32 %v2245, %v2287
  %v2289 = vpop.f32.mrb[0].mxu0
  %v2290 = vadd.f32 %v2247, %v2289
  %v2291 = vpop.f32.mrb[0].mxu0
  %v2292 = vadd.f32 %v2249, %v2291
  %v2293 = vpop.f32.mrb[0].mxu0
  %v2294 = vadd.f32 %v2251, %v2293
  %2295 = vdwg.mxu0
  %2296 = vmatprep.subr.bf16.mxu0 %v1806
  %2297 = vmatpush1.bf16.msra.mxu0 %v1805
  %2298 = vmatprep.subr.bf16.mxu0 %v1810
  %2299 = vmatpush1.bf16.msra.mxu0 %v1809
  %2300 = vmatprep.subr.bf16.mxu0 0
  %2301 = vmatpush1.bf16.msra.mxu0 0
  %2302 = vmatprep.subr.bf16.mxu0 0
  %2303 = vmatpush1.bf16.msra.mxu0 0
  %2304 = vmatprep.subr.bf16.mxu0 0
  %2305 = vmatpush1.bf16.msra.mxu0 0
  %2306 = vmatprep.subr.bf16.mxu0 0
  %2307 = vmatpush1.bf16.msra.mxu0 0
  %2308 = vmatprep.subr.bf16.mxu0 0
  %2309 = vmatpush1.bf16.msra.mxu0 0
  %2310 = vmatprep.subr.bf16.mxu0 0
  %2311 = vmatpush1.bf16.msra.mxu0 0
  %2312 = vmatprep.subr.bf16.mxu0 0
  %2313 = vmatpush1.bf16.msra.mxu0 0
  %2314 = vmatprep.subr.bf16.mxu0 0
  %2315 = vmatpush1.bf16.msra.mxu0 0
  %2316 = vmatprep.subr.bf16.mxu0 0
  %2317 = vmatpush1.bf16.msra.mxu0 0
  %2318 = vmatprep.subr.bf16.mxu0 0
  %2319 = vmatpush1.bf16.msra.mxu0 0
  %2320 = vmatprep.subr.bf16.mxu0 0
  %2321 = vmatpush1.bf16.msra.mxu0 0
  %2322 = vmatprep.subr.bf16.mxu0 0
  %2323 = vmatpush1.bf16.msra.mxu0 0
  %2324 = vmatprep.subr.bf16.mxu0 0
  %2325 = vmatpush1.bf16.msra.mxu0 0
  %2326 = vmatprep.subr.bf16.mxu0 0
  %2327 = vmatpush1.bf16.msra.mxu0 0
  %2328 = vmatprep.mubr.bf16.mxu0 0
  %2329 = vmatmul.mubr.bf16.gmra.mrb[0].mxu0 %v2208
  %v2330 = vpop.f32.mrb[0].mxu0
  %v2331 = vadd.f32 %v2288, %v2330
  %v2332 = vpop.f32.mrb[0].mxu0
  %v2333 = vadd.f32 %v2290, %v2332
  %v2334 = vpop.f32.mrb[0].mxu0
  %v2335 = vadd.f32 %v2292, %v2334
  %v2336 = vpop.f32.mrb[0].mxu0
  %v2337 = vadd.f32 %v2294, %v2336
  %2338 = vdwg.mxu0
  %2339 = vmatprep.subr.bf16.mxu0 %v1680
  %2340 = vmatpush1.bf16.msra.mxu0 %v1679
  %2341 = vmatprep.subr.bf16.mxu0 %v1684
  %2342 = vmatpush1.bf16.msra.mxu0 %v1683
  %2343 = vmatprep.subr.bf16.mxu0 %v1688
  %2344 = vmatpush1.bf16.msra.mxu0 %v1687
  %2345 = vmatprep.subr.bf16.mxu0 %v1692
  %2346 = vmatpush1.bf16.msra.mxu0 %v1691
  %2347 = vmatprep.subr.bf16.mxu0 %v1696
  %2348 = vmatpush1.bf16.msra.mxu0 %v1695
  %2349 = vmatprep.subr.bf16.mxu0 %v1700
  %2350 = vmatpush1.bf16.msra.mxu0 %v1699
  %2351 = vmatprep.subr.bf16.mxu0 %v1704
  %2352 = vmatpush1.bf16.msra.mxu0 %v1703
  %2353 = vmatprep.subr.bf16.mxu0 %v1708
  %2354 = vmatpush1.bf16.msra.mxu0 %v1707
  %2355 = vmatprep.subr.bf16.mxu0 %v1712
  %2356 = vmatpush1.bf16.msra.mxu0 %v1711
  %2357 = vmatprep.subr.bf16.mxu0 %v1716
  %2358 = vmatpush1.bf16.msra.mxu0 %v1715
  %2359 = vmatprep.subr.bf16.mxu0 %v1720
  %2360 = vmatpush1.bf16.msra.mxu0 %v1719
  %2361 = vmatprep.subr.bf16.mxu0 %v1724
  %2362 = vmatpush1.bf16.msra.mxu0 %v1723
  %2363 = vmatprep.subr.bf16.mxu0 %v1728
  %2364 = vmatpush1.bf16.msra.mxu0 %v1727
  %2365 = vmatprep.subr.bf16.mxu0 %v1732
  %2366 = vmatpush1.bf16.msra.mxu0 %v1731
  %2367 = vmatprep.subr.bf16.mxu0 %v1736
  %2368 = vmatpush1.bf16.msra.mxu0 %v1735
  %2369 = vmatprep.subr.bf16.mxu0 %v1740
  %2370 = vmatpush1.bf16.msra.mxu0 %v1739
  %2371 = vmatprep.mubr.bf16.mxu0 %v51
  %2372 = vmatmul.mubr.bf16.gmra.mrb[0].mxu0 %v50
  %v2373 = vpop.f32.mrb[0].mxu0
  %v2374 = vadd.f32 0.0, %v2373
  %v2375 = vpop.f32.mrb[0].mxu0
  %v2376 = vadd.f32 0.0, %v2375
  %v2377 = vpop.f32.mrb[0].mxu0
  %v2378 = vadd.f32 0.0, %v2377
  %v2379 = vpop.f32.mrb[0].mxu0
  %v2380 = vadd.f32 0.0, %v2379
  %2381 = vdwg.mxu0
  %2382 = vmatprep.subr.bf16.mxu0 %v1744
  %2383 = vmatpush1.bf16.msra.mxu0 %v1743
  %2384 = vmatprep.subr.bf16.mxu0 %v1748
  %2385 = vmatpush1.bf16.msra.mxu0 %v1747
  %2386 = vmatprep.subr.bf16.mxu0 %v1752
  %2387 = vmatpush1.bf16.msra.mxu0 %v1751
  %2388 = vmatprep.subr.bf16.mxu0 %v1756
  %2389 = vmatpush1.bf16.msra.mxu0 %v1755
  %2390 = vmatprep.subr.bf16.mxu0 %v1760
  %2391 = vmatpush1.bf16.msra.mxu0 %v1759
  %2392 = vmatprep.subr.bf16.mxu0 %v1764
  %2393 = vmatpush1.bf16.msra.mxu0 %v1763
  %2394 = vmatprep.subr.bf16.mxu0 %v1768
  %2395 = vmatpush1.bf16.msra.mxu0 %v1767
  %2396 = vmatprep.subr.bf16.mxu0 %v1772
  %2397 = vmatpush1.bf16.msra.mxu0 %v1771
  %2398 = vmatprep.subr.bf16.mxu0 %v1776
  %2399 = vmatpush1.bf16.msra.mxu0 %v1775
  %2400 = vmatprep.subr.bf16.mxu0 %v1780
  %2401 = vmatpush1.bf16.msra.mxu0 %v1779
  %2402 = vmatprep.subr.bf16.mxu0 %v1784
  %2403 = vmatpush1.bf16.msra.mxu0 %v1783
  %2404 = vmatprep.subr.bf16.mxu0 %v1788
  %2405 = vmatpush1.bf16.msra.mxu0 %v1787
  %2406 = vmatprep.subr.bf16.mxu0 %v1792
  %2407 = vmatpush1.bf16.msra.mxu0 %v1791
  %2408 = vmatprep.subr.bf16.mxu0 %v1796
  %2409 = vmatpush1.bf16.msra.mxu0 %v1795
  %2410 = vmatprep.subr.bf16.mxu0 %v1800
  %2411 = vmatpush1.bf16.msra.mxu0 %v1799
  %2412 = vmatprep.subr.bf16.mxu0 %v1804
  %2413 = vmatpush1.bf16.msra.mxu0 %v1803
  %2414 = vmatprep.mubr.bf16.mxu0 %v53
  %2415 = vmatmul.mubr.bf16.gmra.mrb[0].mxu0 %v52
  %v2416 = vpop.f32.mrb[0].mxu0
  %v2417 = vadd.f32 %v2374, %v2416
  %v2418 = vpop.f32.mrb[0].mxu0
  %v2419 = vadd.f32 %v2376, %v2418
  %v2420 = vpop.f32.mrb[0].mxu0
  %v2421 = vadd.f32 %v2378, %v2420
  %v2422 = vpop.f32.mrb[0].mxu0
  %v2423 = vadd.f32 %v2380, %v2422
  %2424 = vdwg.mxu0
  %2425 = vmatprep.subr.bf16.mxu0 %v1808
  %2426 = vmatpush1.bf16.msra.mxu0 %v1807
  %2427 = vmatprep.subr.bf16.mxu0 %v1812
  %2428 = vmatpush1.bf16.msra.mxu0 %v1811
  %2429 = vmatprep.subr.bf16.mxu0 0
  %2430 = vmatpush1.bf16.msra.mxu0 0
  %2431 = vmatprep.subr.bf16.mxu0 0
  %2432 = vmatpush1.bf16.msra.mxu0 0
  %2433 = vmatprep.subr.bf16.mxu0 0
  %2434 = vmatpush1.bf16.msra.mxu0 0
  %2435 = vmatprep.subr.bf16.mxu0 0
  %2436 = vmatpush1.bf16.msra.mxu0 0
  %2437 = vmatprep.subr.bf16.mxu0 0
  %2438 = vmatpush1.bf16.msra.mxu0 0
  %2439 = vmatprep.subr.bf16.mxu0 0
  %2440 = vmatpush1.bf16.msra.mxu0 0
  %2441 = vmatprep.subr.bf16.mxu0 0
  %2442 = vmatpush1.bf16.msra.mxu0 0
  %2443 = vmatprep.subr.bf16.mxu0 0
  %2444 = vmatpush1.bf16.msra.mxu0 0
  %2445 = vmatprep.subr.bf16.mxu0 0
  %2446 = vmatpush1.bf16.msra.mxu0 0
  %2447 = vmatprep.subr.bf16.mxu0 0
  %2448 = vmatpush1.bf16.msra.mxu0 0
  %2449 = vmatprep.subr.bf16.mxu0 0
  %2450 = vmatpush1.bf16.msra.mxu0 0
  %2451 = vmatprep.subr.bf16.mxu0 0
  %2452 = vmatpush1.bf16.msra.mxu0 0
  %2453 = vmatprep.subr.bf16.mxu0 0
  %2454 = vmatpush1.bf16.msra.mxu0 0
  %2455 = vmatprep.subr.bf16.mxu0 0
  %2456 = vmatpush1.bf16.msra.mxu0 0
  %2457 = vmatprep.mubr.bf16.mxu0 0
  %2458 = vmatmul.mubr.bf16.gmra.mrb[0].mxu0 %v2208
  %v2459 = vpop.f32.mrb[0].mxu0
  %v2460 = vadd.f32 %v2417, %v2459
  %v2461 = vpop.f32.mrb[0].mxu0
  %v2462 = vadd.f32 %v2419, %v2461
  %v2463 = vpop.f32.mrb[0].mxu0
  %v2464 = vadd.f32 %v2421, %v2463
  %v2465 = vpop.f32.mrb[0].mxu0
  %v2466 = vadd.f32 %v2423, %v2465
  %2467 = vdwg.mxu0
  %v2468 = vadd.f32 %v2070, %v2331
  %v2469 = vadd.f32 %v2072, %v2333
  %v2470 = vadd.f32 %v2199, %v2460
  %v2471 = vadd.f32 %v2201, %v2462
  %v2472 = vadd.f32 %v2074, %v2335
  %v2473 = vadd.f32 %v2076, %v2337
  %v2474 = vadd.f32 %v2203, %v2464
  %v2475 = vadd.f32 %v2205, %v2466
  %2484 = vrot.lane.b32.xlu0 %v2468, 9
  %v2485 = vpop.permute.xlu0 %2484
  %2486 = vrot.lane.b32.xlu0 %v2469, 9
  %v2487 = vpop.permute.xlu0 %2486
  %2488 = vrot.lane.b32.xlu0 %v2470, 9
  %v2489 = vpop.permute.xlu0 %2488
  %2490 = vrot.lane.b32.xlu0 %v2471, 9
  %v2491 = vpop.permute.xlu0 %2490
  %2492 = vrot.lane.b32.xlu0 %v2472, 9
  %v2493 = vpop.permute.xlu0 %2492
  %2494 = vrot.lane.b32.xlu0 %v2473, 9
  %v2495 = vpop.permute.xlu0 %2494
  %2496 = vrot.lane.b32.xlu0 %v2474, 9
  %v2497 = vpop.permute.xlu0 %2496
  %2498 = vrot.lane.b32.xlu0 %v2475, 9
  %v2499 = vpop.permute.xlu0 %2498
  %vm2500 = vcmask 72704
  %v2501 = vsel %vm2500, %v2485, %v2487
  %v2502 = vsel %vm2500, %v2487, %v2489
  %v2503 = vsel %vm2500, %v2489, %v2491
  %v2504 = vsel %vm2500, %v2493, %v2495
  %v2505 = vsel %vm2500, %v2495, %v2497
  %v2506 = vsel %vm2500, %v2497, %v2499
  %v2517 = vadd.f32 %v15, %v2485
  %v2518 = vadd.f32 %v16, %v2501
  %v2519 = vadd.f32 %v17, %v2502
  %v2520 = vadd.f32 %v18, %v2503
  %v2521 = vadd.f32 %v19, %v2491
  %v2522 = vadd.f32 %v20, %v2493
  %v2523 = vadd.f32 %v21, %v2504
  %v2524 = vadd.f32 %v22, %v2505
  %v2525 = vadd.f32 %v23, %v2506
  %v2526 = vadd.f32 %v24, %v2499
  %2537 = vrot.lane.b32.xlu0 %v2517, 119
  %v2538 = vpop.permute.xlu0 %2537
  %2539 = vrot.lane.b32.xlu0 %v2518, 119
  %v2540 = vpop.permute.xlu0 %2539
  %2541 = vrot.lane.b32.xlu0 %v2519, 119
  %v2542 = vpop.permute.xlu0 %2541
  %2543 = vrot.lane.b32.xlu0 %v2520, 119
  %v2544 = vpop.permute.xlu0 %2543
  %2545 = vrot.lane.b32.xlu0 %v2521, 119
  %v2546 = vpop.permute.xlu0 %2545
  %2547 = vrot.lane.b32.xlu0 %v2522, 119
  %v2548 = vpop.permute.xlu0 %2547
  %2549 = vrot.lane.b32.xlu0 %v2523, 119
  %v2550 = vpop.permute.xlu0 %2549
  %2551 = vrot.lane.b32.xlu0 %v2524, 119
  %v2552 = vpop.permute.xlu0 %2551
  %2553 = vrot.lane.b32.xlu0 %v2525, 119
  %v2554 = vpop.permute.xlu0 %2553
  %2555 = vrot.lane.b32.xlu0 %v2526, 119
  %v2556 = vpop.permute.xlu0 %2555
  %vm2557 = vcmask 973824
  %v2558 = vsel %vm2557, %v2538, %v2540
  %v2559 = vsel %vm2557, %v2540, %v2542
  %v2560 = vsel %vm2557, %v2542, %v2544
  %v2561 = vsel %vm2557, %v2544, %v2546
  %v2562 = vsel %vm2557, %v2548, %v2550
  %v2563 = vsel %vm2557, %v2550, %v2552
  %v2564 = vsel %vm2557, %v2552, %v2554
  %v2565 = vsel %vm2557, %v2554, %v2556
  %2574 = vst [vmem:[%s3] sm:$0xff] %v2558
  %2575 = vst [vmem:[%s3 + $0x8] sm:$0xff] %v2559
  %2576 = vst [vmem:[%s3 + $0x10] sm:$0xff] %v2560
  %2577 = vst [vmem:[%s3 + $0x18] sm:$0xff] %v2561
  %2578 = vst [vmem:[%s3 + $0x20] sm:$0xff] %v2562
  %2579 = vst [vmem:[%s3 + $0x28] sm:$0xff] %v2563
  %2580 = vst [vmem:[%s3 + $0x30] sm:$0xff] %v2564
  %2581 = vst [vmem:[%s3 + $0x38] sm:$0xff] %v2565
  // Predicated region
  $region14: #{_bandmask_apply.1} parent=0 // pred_check
    _
  $region15: #{_bandmask_apply.1} parent=0 // pred_check_branch
    %2583 = sbr.rel (0) target = $region17
  $region16: #{_bandmask_apply.1} parent=0 // pred_region
    _
  $region17: #{_bandmask_apply.1} parent=0 // pred_fallthru
    _
  // Predicated region
  $region18: #{_bandmask_apply.1} parent=0 // pred_check
    _
  $region19: #{_bandmask_apply.1} parent=0 // pred_check_branch
    %2585 = sbr.rel (0) target = $region21
  $region20: #{_bandmask_apply.1} parent=0 // pred_region
    _
  $region21: #{_bandmask_apply.1} parent=0 // pred_fallthru
    _

</llo_original>
